<compile_context>
chip_gen: v7x
topology: tpu7x:2x2x1
jax: 0.10.0
libtpu: 0.0.40
codegen_flags: <defaults>
</compile_context>

<pallas_src>
import functools

import jax
import jax.numpy as jnp
from jax import lax
from jax.experimental import pallas as pl
from jax.experimental.pallas import tpu as pltpu


# ----------------------------- config (mirrors the torch config object) ------
class Config:
    n_embed = 128      # vocab size (chosen lane-dense: multiple of 128)
    n_layers = 1       # single layer -> dropout forced to 0 in VVUL.__init__
    dp_ratio = 0.2     # unused because n_layers == 1


# ----------------------------- Pallas kernel ---------------------------------
def _vvul_kernel(tok_ref, emb_ref, wih_ref, whh_ref, b_ref, out_ref,
                 hs_ref, gx_ref, *, seq_len, batch):
    """Whole VVUL forward in ONE kernel invocation (no time-step grid)."""
    H = whh_ref.shape[0]          # hidden size
    V = emb_ref.shape[0]          # vocab size
    TB = seq_len * batch

    # ---- 1) Embedding lookup as a one-hot matmul (MXU-friendly gather) ------
    tok = tok_ref[...]                                              # (TB, 1) int32
    vocab_ids = lax.broadcasted_iota(jnp.int32, (TB, V), 1)
    one_hot = (vocab_ids == tok).astype(jnp.float32)                # (TB, V)
    x = jnp.dot(one_hot, emb_ref[...],
                preferred_element_type=jnp.float32)                 # (TB, H)

    # ---- 2) Hoisted input projection (off the serial recurrence path) -------
    # gates_x = x @ W_ih^T + (b_ih + b_hh): one (TB,H)@(H,4H) matmul + bias.
    gx_ref[...] = (jnp.dot(x, wih_ref[...], preferred_element_type=jnp.float32)
                   + b_ref[...])

    whh = whh_ref[...]                                              # (H, 4H) in vregs

    # ---- 3) Recurrence: h/c live in registers (fori_loop carry) -------------
    def step(t, carry):
        h, c = carry
        row = t * batch
        # shifted_outputs[t] = h^{(t)} (hidden BEFORE consuming x_t; h^{(0)}=0)
        hs_ref[pl.ds(row, batch), :] = h
        gates = gx_ref[pl.ds(row, batch), :] + jnp.dot(
            h, whh, preferred_element_type=jnp.float32)             # (B, 4H)
        # PyTorch gate order [i, f, g, o]. H-wide lane slices are cheap XLU
        # selects that overlap with the MXU/EUP work of the step.
        i_g = jax.nn.sigmoid(gates[:, 0 * H:1 * H])
        f_g = jax.nn.sigmoid(gates[:, 1 * H:2 * H])
        g_g = jnp.tanh(gates[:, 2 * H:3 * H])
        o_g = jax.nn.sigmoid(gates[:, 3 * H:4 * H])
        c_new = f_g * c + i_g * g_g
        h_new = o_g * jnp.tanh(c_new)
        return h_new, c_new

    h0 = jnp.zeros((batch, H), jnp.float32)
    c0 = jnp.zeros((batch, H), jnp.float32)
    lax.fori_loop(0, seq_len, step, (h0, c0), unroll=True)

    # ---- 4) Tied output projection: logits = shifted_h @ E^T ----------------
    logits = lax.dot_general(hs_ref[...], emb_ref[...],
                             dimension_numbers=(((1,), (1,)), ((), ())),
                             preferred_element_type=jnp.float32)    # (TB, V)
    out_ref[...] = logits.astype(out_ref.dtype)


# ----------------------------- wrapper ----------------------------------------
@jax.jit
def vvul_forward(tokens, emb_w, w_ih, w_hh, b_ih, b_hh):
    """tokens: (T,B) int32; emb_w: (V,H); w_ih/w_hh: (4H,H); b_ih/b_hh: (4H,).
    Returns logits (T, B, V) — exactly VVUL.forward."""
    T, B = tokens.shape
    V, H = emb_w.shape

    # Glue (free in XLA): pre-transpose weights, fuse biases, flatten tokens.
    wih_t = w_ih.T                       # (H, 4H)
    whh_t = w_hh.T                       # (H, 4H)
    bias = (b_ih + b_hh)[None, :]        # (1, 4H)
    tok2d = tokens.reshape(T * B, 1).astype(jnp.int32)

    kernel = functools.partial(_vvul_kernel, seq_len=T, batch=B)
    vmem = lambda: pl.BlockSpec(memory_space=pltpu.MemorySpace.VMEM)

    flops = (2 * T * B * V * H          # one-hot embedding matmul
             + 2 * T * B * H * 4 * H    # hoisted input projection
             + 2 * T * B * H * 4 * H    # recurrent h @ W_hh
             + 2 * T * B * H * V)       # tied output projection
    bytes_accessed = 4 * (T * B * (1 + V) + V * H + 2 * H * 4 * H + 4 * H)

    logits_flat = pl.pallas_call(
        kernel,
        out_shape=jax.ShapeDtypeStruct((T * B, V), jnp.float32),
        in_specs=[vmem() for _ in range(5)],       # all operands resident in VMEM
        out_specs=vmem(),
        scratch_shapes=[
            pltpu.VMEM((T * B, H), jnp.float32),       # shifted hidden states
            pltpu.VMEM((T * B, 4 * H), jnp.float32),   # hoisted input projection
        ],
        cost_estimate=pl.CostEstimate(
            flops=flops,
            transcendentals=T * B * 5 * H,
            bytes_accessed=bytes_accessed),
    )(tok2d, emb_w, wih_t, whh_t, bias)
    return logits_flat.reshape(T, B, V)


# ----------------------------- pure-JAX reference (for verification) ---------
def vvul_reference(tokens, emb_w, w_ih, w_hh, b_ih, b_hh):
    T, B = tokens.shape
    V, H = emb_w.shape
    x = emb_w[tokens]                              # (T, B, H) embedding lookup
    gx = x @ w_ih.T + (b_ih + b_hh)                # hoisted, same order as kernel
    whh_t = w_hh.T

    def step(carry, gx_t):
        h, c = carry
        gates = gx_t + h @ whh_t
        i_g = jax.nn.sigmoid(gates[:, 0 * H:1 * H])
        f_g = jax.nn.sigmoid(gates[:, 1 * H:2 * H])
        g_g = jnp.tanh(gates[:, 2 * H:3 * H])
        o_g = jax.nn.sigmoid(gates[:, 3 * H:4 * H])
        c_new = f_g * c + i_g * g_g
        h_new = o_g * jnp.tanh(c_new)
        return (h_new, c_new), h                   # emit PRE-step h = shifted output

    init = (jnp.zeros((B, H), jnp.float32), jnp.zeros((B, H), jnp.float32))
    _, shifted = lax.scan(step, init, gx)          # (T, B, H)
    return shifted @ emb_w.T                       # tied weights, no bias


# ----------------------------- main -------------------------------------------
if __name__ == "__main__":
    cfg = Config()
    T, B = 8, 8
    H = 32                 # h_size passed to VVUL
    V = cfg.n_embed

    key = jax.random.PRNGKey(0)
    kt, ke, k1, k2, k3, k4 = jax.random.split(key, 6)

    tokens = jax.random.randint(kt, (T, B), 0, V, dtype=jnp.int32)   # batch.hypothesis
    emb_w = jax.random.normal(ke, (V, H), dtype=jnp.float32)         # nn.Embedding (tied with out)
    bound = 1.0 / jnp.sqrt(jnp.float32(H))                           # PyTorch LSTM init
    w_ih = jax.random.uniform(k1, (4 * H, H), jnp.float32, -bound, bound)
    w_hh = jax.random.uniform(k2, (4 * H, H), jnp.float32, -bound, bound)
    b_ih = jax.random.uniform(k3, (4 * H,), jnp.float32, -bound, bound)
    b_hh = jax.random.uniform(k4, (4 * H,), jnp.float32, -bound, bound)

    out = vvul_forward(tokens, emb_w, w_ih, w_hh, b_ih, b_hh)
    out = jax.block_until_ready(out)

    ref = vvul_reference(tokens, emb_w, w_ih, w_hh, b_ih, b_hh)
    assert out.shape == (T, B, V)
    assert jnp.allclose(out, ref, atol=1e-4, rtol=1e-4), "Pallas VVUL mismatch vs JAX ref"

    # TODO(synk): multi-layer / dropout paths (n_layers > 1) are not exercised by this
    # config (dropout is forced to 0 when n_layers == 1, matching VVUL.__init__).
    print("KERNEL_OK")
</pallas_src>

<mosaic_0001>
module attributes {stable_mosaic.version = 11 : i64} {
  func.func @_vvul_kernel(%arg0: memref<64x1xi32, #tpu.memory_space<vmem>>, %arg1: memref<128x32xf32, #tpu.memory_space<vmem>>, %arg2: memref<32x128xf32, #tpu.memory_space<vmem>>, %arg3: memref<32x128xf32, #tpu.memory_space<vmem>>, %arg4: memref<1x128xf32, #tpu.memory_space<vmem>>, %arg5: memref<64x128xf32, #tpu.memory_space<vmem>>, %arg6: memref<64x32xf32, #tpu.memory_space<vmem>>, %arg7: memref<64x128xf32, #tpu.memory_space<vmem>>) attributes {dimension_semantics = [], scalar_prefetch = 0 : i64, scratch_operands = 2 : i64, tpu.core_type = #tpu.core_type<tc>} {
    %c0 = arith.constant 0 : index
    %c0_0 = arith.constant 0 : index
    %0 = vector.load %arg0[%c0, %c0_0] : memref<64x1xi32, #tpu.memory_space<vmem>>, vector<64x1xi32>
    %1 = tpu.iota {dimensions = array<i32: 1>} : vector<64x128xi32>
    %2 = vector.broadcast %0 : vector<64x1xi32> to vector<64x128xi32>
    %3 = arith.cmpi eq, %1, %2 : vector<64x128xi32>
    %4 = arith.extui %3 : vector<64x128xi1> to vector<64x128xi32>
    %5 = arith.sitofp %4 : vector<64x128xi32> to vector<64x128xf32>
    %c0_1 = arith.constant 0 : index
    %c0_2 = arith.constant 0 : index
    %6 = vector.load %arg1[%c0_1, %c0_2] : memref<128x32xf32, #tpu.memory_space<vmem>>, vector<128x32xf32>
    %cst = arith.constant dense<0.000000e+00> : vector<64x32xf32>
    %7 = tpu.matmul %5, %6, %cst {dimension_numbers = #tpu.dot_dimension_numbers<[1], [0], [0], [1], [0, 0, 1, 1], [], []>} : vector<64x128xf32>, vector<128x32xf32>, vector<64x32xf32> -> vector<64x32xf32>
    %c0_3 = arith.constant 0 : index
    %c0_4 = arith.constant 0 : index
    %8 = vector.load %arg2[%c0_3, %c0_4] : memref<32x128xf32, #tpu.memory_space<vmem>>, vector<32x128xf32>
    %cst_5 = arith.constant dense<0.000000e+00> : vector<64x128xf32>
    %9 = tpu.matmul %7, %8, %cst_5 {dimension_numbers = #tpu.dot_dimension_numbers<[1], [0], [0], [1], [0, 0, 1, 1], [], []>} : vector<64x32xf32>, vector<32x128xf32>, vector<64x128xf32> -> vector<64x128xf32>
    %c0_6 = arith.constant 0 : index
    %c0_7 = arith.constant 0 : index
    %10 = vector.load %arg4[%c0_6, %c0_7] : memref<1x128xf32, #tpu.memory_space<vmem>>, vector<1x128xf32>
    %11 = vector.broadcast %10 : vector<1x128xf32> to vector<64x128xf32>
    %12 = arith.addf %9, %11 : vector<64x128xf32>
    %c0_8 = arith.constant 0 : index
    %c0_9 = arith.constant 0 : index
    %13 = vector.load %arg7[%c0_8, %c0_9] : memref<64x128xf32, #tpu.memory_space<vmem>>, vector<64x128xf32>
    tpu.vector_store %arg7[%c0_8, %c0_9], %12 {strides = array<i32>} : memref<64x128xf32, #tpu.memory_space<vmem>>, vector<64x128xf32>,
    %c0_10 = arith.constant 0 : index
    %c0_11 = arith.constant 0 : index
    %14 = vector.load %arg3[%c0_10, %c0_11] : memref<32x128xf32, #tpu.memory_space<vmem>>, vector<32x128xf32>
    %cst_12 = arith.constant 0.000000e+00 : f32
    %15 = vector.broadcast %cst_12 : f32 to vector<8x32xf32>
    %cst_13 = arith.constant 0.000000e+00 : f32
    %16 = vector.broadcast %cst_13 : f32 to vector<8x32xf32>
    %c0_i32 = arith.constant 0 : i32
    %c8_i32 = arith.constant 8 : i32
    %17 = arith.muli %c0_i32, %c8_i32 : i32
    %18 = arith.index_cast %17 : i32 to index
    %c0_14 = arith.constant 0 : index
    %19 = vector.load %arg6[%18, %c0_14] : memref<64x32xf32, #tpu.memory_space<vmem>>, vector<8x32xf32>
    tpu.vector_store %arg6[%18, %c0_14], %15 {strides = array<i32>} : memref<64x32xf32, #tpu.memory_space<vmem>>, vector<8x32xf32>,
    %20 = arith.index_cast %17 : i32 to index
    %c0_15 = arith.constant 0 : index
    %21 = vector.load %arg7[%20, %c0_15] : memref<64x128xf32, #tpu.memory_space<vmem>>, vector<8x128xf32>
    %cst_16 = arith.constant dense<0.000000e+00> : vector<8x128xf32>
    %22 = tpu.matmul %15, %14, %cst_16 {dimension_numbers = #tpu.dot_dimension_numbers<[1], [0], [0], [1], [0, 0, 1, 1], [], []>} : vector<8x32xf32>, vector<32x128xf32>, vector<8x128xf32> -> vector<8x128xf32>
    %23 = arith.addf %21, %22 : vector<8x128xf32>
    %24 = vector.extract_strided_slice %23 {offsets = [0, 0], sizes = [8, 32], strides = [1, 1]} : vector<8x128xf32> to vector<8x32xf32>
    %25 = arith.negf %24 : vector<8x32xf32>
    %26 = math.exp %25 : vector<8x32xf32>
    %cst_17 = arith.constant 1.000000e+00 : f32
    %27 = vector.broadcast %cst_17 : f32 to vector<8x32xf32>
    %28 = arith.addf %27, %26 : vector<8x32xf32>
    %29 = arith.divf %27, %28 : vector<8x32xf32>
    %30 = vector.extract_strided_slice %23 {offsets = [0, 32], sizes = [8, 32], strides = [1, 1]} : vector<8x128xf32> to vector<8x32xf32>
    %31 = arith.negf %30 : vector<8x32xf32>
    %32 = math.exp %31 : vector<8x32xf32>
    %cst_18 = arith.constant 1.000000e+00 : f32
    %33 = vector.broadcast %cst_18 : f32 to vector<8x32xf32>
    %34 = arith.addf %33, %32 : vector<8x32xf32>
    %35 = arith.divf %33, %34 : vector<8x32xf32>
    %36 = vector.extract_strided_slice %23 {offsets = [0, 64], sizes = [8, 32], strides = [1, 1]} : vector<8x128xf32> to vector<8x32xf32>
    %37 = math.tanh %36 : vector<8x32xf32>
    %38 = vector.extract_strided_slice %23 {offsets = [0, 96], sizes = [8, 32], strides = [1, 1]} : vector<8x128xf32> to vector<8x32xf32>
    %39 = arith.negf %38 : vector<8x32xf32>
    %40 = math.exp %39 : vector<8x32xf32>
    %cst_19 = arith.constant 1.000000e+00 : f32
    %41 = vector.broadcast %cst_19 : f32 to vector<8x32xf32>
    %42 = arith.addf %41, %40 : vector<8x32xf32>
    %43 = arith.divf %41, %42 : vector<8x32xf32>
    %44 = arith.mulf %35, %16 : vector<8x32xf32>
    %45 = arith.mulf %29, %37 : vector<8x32xf32>
    %46 = arith.addf %44, %45 : vector<8x32xf32>
    %47 = math.tanh %46 : vector<8x32xf32>
    %48 = arith.mulf %43, %47 : vector<8x32xf32>
    %c1_i32 = arith.constant 1 : i32
    %c8_i32_20 = arith.constant 8 : i32
    %49 = arith.muli %c1_i32, %c8_i32_20 : i32
    %50 = arith.index_cast %49 : i32 to index
    %c0_21 = arith.constant 0 : index
    %51 = vector.load %arg6[%50, %c0_21] : memref<64x32xf32, #tpu.memory_space<vmem>>, vector<8x32xf32>
    tpu.vector_store %arg6[%50, %c0_21], %48 {strides = array<i32>} : memref<64x32xf32, #tpu.memory_space<vmem>>, vector<8x32xf32>,
    %52 = arith.index_cast %49 : i32 to index
    %c0_22 = arith.constant 0 : index
    %53 = vector.load %arg7[%52, %c0_22] : memref<64x128xf32, #tpu.memory_space<vmem>>, vector<8x128xf32>
    %cst_23 = arith.constant dense<0.000000e+00> : vector<8x128xf32>
    %54 = tpu.matmul %48, %14, %cst_23 {dimension_numbers = #tpu.dot_dimension_numbers<[1], [0], [0], [1], [0, 0, 1, 1], [], []>} : vector<8x32xf32>, vector<32x128xf32>, vector<8x128xf32> -> vector<8x128xf32>
    %55 = arith.addf %53, %54 : vector<8x128xf32>
    %56 = vector.extract_strided_slice %55 {offsets = [0, 0], sizes = [8, 32], strides = [1, 1]} : vector<8x128xf32> to vector<8x32xf32>
    %57 = arith.negf %56 : vector<8x32xf32>
    %58 = math.exp %57 : vector<8x32xf32>
    %cst_24 = arith.constant 1.000000e+00 : f32
    %59 = vector.broadcast %cst_24 : f32 to vector<8x32xf32>
    %60 = arith.addf %59, %58 : vector<8x32xf32>
    %61 = arith.divf %59, %60 : vector<8x32xf32>
    %62 = vector.extract_strided_slice %55 {offsets = [0, 32], sizes = [8, 32], strides = [1, 1]} : vector<8x128xf32> to vector<8x32xf32>
    %63 = arith.negf %62 : vector<8x32xf32>
    %64 = math.exp %63 : vector<8x32xf32>
    %cst_25 = arith.constant 1.000000e+00 : f32
    %65 = vector.broadcast %cst_25 : f32 to vector<8x32xf32>
    %66 = arith.addf %65, %64 : vector<8x32xf32>
    %67 = arith.divf %65, %66 : vector<8x32xf32>
    %68 = vector.extract_strided_slice %55 {offsets = [0, 64], sizes = [8, 32], strides = [1, 1]} : vector<8x128xf32> to vector<8x32xf32>
    %69 = math.tanh %68 : vector<8x32xf32>
    %70 = vector.extract_strided_slice %55 {offsets = [0, 96], sizes = [8, 32], strides = [1, 1]} : vector<8x128xf32> to vector<8x32xf32>
    %71 = arith.negf %70 : vector<8x32xf32>
    %72 = math.exp %71 : vector<8x32xf32>
    %cst_26 = arith.constant 1.000000e+00 : f32
    %73 = vector.broadcast %cst_26 : f32 to vector<8x32xf32>
    %74 = arith.addf %73, %72 : vector<8x32xf32>
    %75 = arith.divf %73, %74 : vector<8x32xf32>
    %76 = arith.mulf %67, %46 : vector<8x32xf32>
    %77 = arith.mulf %61, %69 : vector<8x32xf32>
    %78 = arith.addf %76, %77 : vector<8x32xf32>
    %79 = math.tanh %78 : vector<8x32xf32>
    %80 = arith.mulf %75, %79 : vector<8x32xf32>
    %c2_i32 = arith.constant 2 : i32
    %c8_i32_27 = arith.constant 8 : i32
    %81 = arith.muli %c2_i32, %c8_i32_27 : i32
    %82 = arith.index_cast %81 : i32 to index
    %c0_28 = arith.constant 0 : index
    %83 = vector.load %arg6[%82, %c0_28] : memref<64x32xf32, #tpu.memory_space<vmem>>, vector<8x32xf32>
    tpu.vector_store %arg6[%82, %c0_28], %80 {strides = array<i32>} : memref<64x32xf32, #tpu.memory_space<vmem>>, vector<8x32xf32>,
    %84 = arith.index_cast %81 : i32 to index
    %c0_29 = arith.constant 0 : index
    %85 = vector.load %arg7[%84, %c0_29] : memref<64x128xf32, #tpu.memory_space<vmem>>, vector<8x128xf32>
    %cst_30 = arith.constant dense<0.000000e+00> : vector<8x128xf32>
    %86 = tpu.matmul %80, %14, %cst_30 {dimension_numbers = #tpu.dot_dimension_numbers<[1], [0], [0], [1], [0, 0, 1, 1], [], []>} : vector<8x32xf32>, vector<32x128xf32>, vector<8x128xf32> -> vector<8x128xf32>
    %87 = arith.addf %85, %86 : vector<8x128xf32>
    %88 = vector.extract_strided_slice %87 {offsets = [0, 0], sizes = [8, 32], strides = [1, 1]} : vector<8x128xf32> to vector<8x32xf32>
    %89 = arith.negf %88 : vector<8x32xf32>
    %90 = math.exp %89 : vector<8x32xf32>
    %cst_31 = arith.constant 1.000000e+00 : f32
    %91 = vector.broadcast %cst_31 : f32 to vector<8x32xf32>
    %92 = arith.addf %91, %90 : vector<8x32xf32>
    %93 = arith.divf %91, %92 : vector<8x32xf32>
    %94 = vector.extract_strided_slice %87 {offsets = [0, 32], sizes = [8, 32], strides = [1, 1]} : vector<8x128xf32> to vector<8x32xf32>
    %95 = arith.negf %94 : vector<8x32xf32>
    %96 = math.exp %95 : vector<8x32xf32>
    %cst_32 = arith.constant 1.000000e+00 : f32
    %97 = vector.broadcast %cst_32 : f32 to vector<8x32xf32>
    %98 = arith.addf %97, %96 : vector<8x32xf32>
    %99 = arith.divf %97, %98 : vector<8x32xf32>
    %100 = vector.extract_strided_slice %87 {offsets = [0, 64], sizes = [8, 32], strides = [1, 1]} : vector<8x128xf32> to vector<8x32xf32>
    %101 = math.tanh %100 : vector<8x32xf32>
    %102 = vector.extract_strided_slice %87 {offsets = [0, 96], sizes = [8, 32], strides = [1, 1]} : vector<8x128xf32> to vector<8x32xf32>
    %103 = arith.negf %102 : vector<8x32xf32>
    %104 = math.exp %103 : vector<8x32xf32>
    %cst_33 = arith.constant 1.000000e+00 : f32
    %105 = vector.broadcast %cst_33 : f32 to vector<8x32xf32>
    %106 = arith.addf %105, %104 : vector<8x32xf32>
    %107 = arith.divf %105, %106 : vector<8x32xf32>
    %108 = arith.mulf %99, %78 : vector<8x32xf32>
    %109 = arith.mulf %93, %101 : vector<8x32xf32>
    %110 = arith.addf %108, %109 : vector<8x32xf32>
    %111 = math.tanh %110 : vector<8x32xf32>
    %112 = arith.mulf %107, %111 : vector<8x32xf32>
    %c3_i32 = arith.constant 3 : i32
    %c8_i32_34 = arith.constant 8 : i32
    %113 = arith.muli %c3_i32, %c8_i32_34 : i32
    %114 = arith.index_cast %113 : i32 to index
    %c0_35 = arith.constant 0 : index
    %115 = vector.load %arg6[%114, %c0_35] : memref<64x32xf32, #tpu.memory_space<vmem>>, vector<8x32xf32>
    tpu.vector_store %arg6[%114, %c0_35], %112 {strides = array<i32>} : memref<64x32xf32, #tpu.memory_space<vmem>>, vector<8x32xf32>,
    %116 = arith.index_cast %113 : i32 to index
    %c0_36 = arith.constant 0 : index
    %117 = vector.load %arg7[%116, %c0_36] : memref<64x128xf32, #tpu.memory_space<vmem>>, vector<8x128xf32>
    %cst_37 = arith.constant dense<0.000000e+00> : vector<8x128xf32>
    %118 = tpu.matmul %112, %14, %cst_37 {dimension_numbers = #tpu.dot_dimension_numbers<[1], [0], [0], [1], [0, 0, 1, 1], [], []>} : vector<8x32xf32>, vector<32x128xf32>, vector<8x128xf32> -> vector<8x128xf32>
    %119 = arith.addf %117, %118 : vector<8x128xf32>
    %120 = vector.extract_strided_slice %119 {offsets = [0, 0], sizes = [8, 32], strides = [1, 1]} : vector<8x128xf32> to vector<8x32xf32>
    %121 = arith.negf %120 : vector<8x32xf32>
    %122 = math.exp %121 : vector<8x32xf32>
    %cst_38 = arith.constant 1.000000e+00 : f32
    %123 = vector.broadcast %cst_38 : f32 to vector<8x32xf32>
    %124 = arith.addf %123, %122 : vector<8x32xf32>
    %125 = arith.divf %123, %124 : vector<8x32xf32>
    %126 = vector.extract_strided_slice %119 {offsets = [0, 32], sizes = [8, 32], strides = [1, 1]} : vector<8x128xf32> to vector<8x32xf32>
    %127 = arith.negf %126 : vector<8x32xf32>
    %128 = math.exp %127 : vector<8x32xf32>
    %cst_39 = arith.constant 1.000000e+00 : f32
    %129 = vector.broadcast %cst_39 : f32 to vector<8x32xf32>
    %130 = arith.addf %129, %128 : vector<8x32xf32>
    %131 = arith.divf %129, %130 : vector<8x32xf32>
    %132 = vector.extract_strided_slice %119 {offsets = [0, 64], sizes = [8, 32], strides = [1, 1]} : vector<8x128xf32> to vector<8x32xf32>
    %133 = math.tanh %132 : vector<8x32xf32>
    %134 = vector.extract_strided_slice %119 {offsets = [0, 96], sizes = [8, 32], strides = [1, 1]} : vector<8x128xf32> to vector<8x32xf32>
    %135 = arith.negf %134 : vector<8x32xf32>
    %136 = math.exp %135 : vector<8x32xf32>
    %cst_40 = arith.constant 1.000000e+00 : f32
    %137 = vector.broadcast %cst_40 : f32 to vector<8x32xf32>
    %138 = arith.addf %137, %136 : vector<8x32xf32>
    %139 = arith.divf %137, %138 : vector<8x32xf32>
    %140 = arith.mulf %131, %110 : vector<8x32xf32>
    %141 = arith.mulf %125, %133 : vector<8x32xf32>
    %142 = arith.addf %140, %141 : vector<8x32xf32>
    %143 = math.tanh %142 : vector<8x32xf32>
    %144 = arith.mulf %139, %143 : vector<8x32xf32>
    %c4_i32 = arith.constant 4 : i32
    %c8_i32_41 = arith.constant 8 : i32
    %145 = arith.muli %c4_i32, %c8_i32_41 : i32
    %146 = arith.index_cast %145 : i32 to index
    %c0_42 = arith.constant 0 : index
    %147 = vector.load %arg6[%146, %c0_42] : memref<64x32xf32, #tpu.memory_space<vmem>>, vector<8x32xf32>
    tpu.vector_store %arg6[%146, %c0_42], %144 {strides = array<i32>} : memref<64x32xf32, #tpu.memory_space<vmem>>, vector<8x32xf32>,
    %148 = arith.index_cast %145 : i32 to index
    %c0_43 = arith.constant 0 : index
    %149 = vector.load %arg7[%148, %c0_43] : memref<64x128xf32, #tpu.memory_space<vmem>>, vector<8x128xf32>
    %cst_44 = arith.constant dense<0.000000e+00> : vector<8x128xf32>
    %150 = tpu.matmul %144, %14, %cst_44 {dimension_numbers = #tpu.dot_dimension_numbers<[1], [0], [0], [1], [0, 0, 1, 1], [], []>} : vector<8x32xf32>, vector<32x128xf32>, vector<8x128xf32> -> vector<8x128xf32>
    %151 = arith.addf %149, %150 : vector<8x128xf32>
    %152 = vector.extract_strided_slice %151 {offsets = [0, 0], sizes = [8, 32], strides = [1, 1]} : vector<8x128xf32> to vector<8x32xf32>
    %153 = arith.negf %152 : vector<8x32xf32>
    %154 = math.exp %153 : vector<8x32xf32>
    %cst_45 = arith.constant 1.000000e+00 : f32
    %155 = vector.broadcast %cst_45 : f32 to vector<8x32xf32>
    %156 = arith.addf %155, %154 : vector<8x32xf32>
    %157 = arith.divf %155, %156 : vector<8x32xf32>
    %158 = vector.extract_strided_slice %151 {offsets = [0, 32], sizes = [8, 32], strides = [1, 1]} : vector<8x128xf32> to vector<8x32xf32>
    %159 = arith.negf %158 : vector<8x32xf32>
    %160 = math.exp %159 : vector<8x32xf32>
    %cst_46 = arith.constant 1.000000e+00 : f32
    %161 = vector.broadcast %cst_46 : f32 to vector<8x32xf32>
    %162 = arith.addf %161, %160 : vector<8x32xf32>
    %163 = arith.divf %161, %162 : vector<8x32xf32>
    %164 = vector.extract_strided_slice %151 {offsets = [0, 64], sizes = [8, 32], strides = [1, 1]} : vector<8x128xf32> to vector<8x32xf32>
    %165 = math.tanh %164 : vector<8x32xf32>
    %166 = vector.extract_strided_slice %151 {offsets = [0, 96], sizes = [8, 32], strides = [1, 1]} : vector<8x128xf32> to vector<8x32xf32>
    %167 = arith.negf %166 : vector<8x32xf32>
    %168 = math.exp %167 : vector<8x32xf32>
    %cst_47 = arith.constant 1.000000e+00 : f32
    %169 = vector.broadcast %cst_47 : f32 to vector<8x32xf32>
    %170 = arith.addf %169, %168 : vector<8x32xf32>
    %171 = arith.divf %169, %170 : vector<8x32xf32>
    %172 = arith.mulf %163, %142 : vector<8x32xf32>
    %173 = arith.mulf %157, %165 : vector<8x32xf32>
    %174 = arith.addf %172, %173 : vector<8x32xf32>
    %175 = math.tanh %174 : vector<8x32xf32>
    %176 = arith.mulf %171, %175 : vector<8x32xf32>
    %c5_i32 = arith.constant 5 : i32
    %c8_i32_48 = arith.constant 8 : i32
    %177 = arith.muli %c5_i32, %c8_i32_48 : i32
    %178 = arith.index_cast %177 : i32 to index
    %c0_49 = arith.constant 0 : index
    %179 = vector.load %arg6[%178, %c0_49] : memref<64x32xf32, #tpu.memory_space<vmem>>, vector<8x32xf32>
    tpu.vector_store %arg6[%178, %c0_49], %176 {strides = array<i32>} : memref<64x32xf32, #tpu.memory_space<vmem>>, vector<8x32xf32>,
    %180 = arith.index_cast %177 : i32 to index
    %c0_50 = arith.constant 0 : index
    %181 = vector.load %arg7[%180, %c0_50] : memref<64x128xf32, #tpu.memory_space<vmem>>, vector<8x128xf32>
    %cst_51 = arith.constant dense<0.000000e+00> : vector<8x128xf32>
    %182 = tpu.matmul %176, %14, %cst_51 {dimension_numbers = #tpu.dot_dimension_numbers<[1], [0], [0], [1], [0, 0, 1, 1], [], []>} : vector<8x32xf32>, vector<32x128xf32>, vector<8x128xf32> -> vector<8x128xf32>
    %183 = arith.addf %181, %182 : vector<8x128xf32>
    %184 = vector.extract_strided_slice %183 {offsets = [0, 0], sizes = [8, 32], strides = [1, 1]} : vector<8x128xf32> to vector<8x32xf32>
    %185 = arith.negf %184 : vector<8x32xf32>
    %186 = math.exp %185 : vector<8x32xf32>
    %cst_52 = arith.constant 1.000000e+00 : f32
    %187 = vector.broadcast %cst_52 : f32 to vector<8x32xf32>
    %188 = arith.addf %187, %186 : vector<8x32xf32>
    %189 = arith.divf %187, %188 : vector<8x32xf32>
    %190 = vector.extract_strided_slice %183 {offsets = [0, 32], sizes = [8, 32], strides = [1, 1]} : vector<8x128xf32> to vector<8x32xf32>
    %191 = arith.negf %190 : vector<8x32xf32>
    %192 = math.exp %191 : vector<8x32xf32>
    %cst_53 = arith.constant 1.000000e+00 : f32
    %193 = vector.broadcast %cst_53 : f32 to vector<8x32xf32>
    %194 = arith.addf %193, %192 : vector<8x32xf32>
    %195 = arith.divf %193, %194 : vector<8x32xf32>
    %196 = vector.extract_strided_slice %183 {offsets = [0, 64], sizes = [8, 32], strides = [1, 1]} : vector<8x128xf32> to vector<8x32xf32>
    %197 = math.tanh %196 : vector<8x32xf32>
    %198 = vector.extract_strided_slice %183 {offsets = [0, 96], sizes = [8, 32], strides = [1, 1]} : vector<8x128xf32> to vector<8x32xf32>
    %199 = arith.negf %198 : vector<8x32xf32>
    %200 = math.exp %199 : vector<8x32xf32>
    %cst_54 = arith.constant 1.000000e+00 : f32
    %201 = vector.broadcast %cst_54 : f32 to vector<8x32xf32>
    %202 = arith.addf %201, %200 : vector<8x32xf32>
    %203 = arith.divf %201, %202 : vector<8x32xf32>
    %204 = arith.mulf %195, %174 : vector<8x32xf32>
    %205 = arith.mulf %189, %197 : vector<8x32xf32>
    %206 = arith.addf %204, %205 : vector<8x32xf32>
    %207 = math.tanh %206 : vector<8x32xf32>
    %208 = arith.mulf %203, %207 : vector<8x32xf32>
    %c6_i32 = arith.constant 6 : i32
    %c8_i32_55 = arith.constant 8 : i32
    %209 = arith.muli %c6_i32, %c8_i32_55 : i32
    %210 = arith.index_cast %209 : i32 to index
    %c0_56 = arith.constant 0 : index
    %211 = vector.load %arg6[%210, %c0_56] : memref<64x32xf32, #tpu.memory_space<vmem>>, vector<8x32xf32>
    tpu.vector_store %arg6[%210, %c0_56], %208 {strides = array<i32>} : memref<64x32xf32, #tpu.memory_space<vmem>>, vector<8x32xf32>,
    %212 = arith.index_cast %209 : i32 to index
    %c0_57 = arith.constant 0 : index
    %213 = vector.load %arg7[%212, %c0_57] : memref<64x128xf32, #tpu.memory_space<vmem>>, vector<8x128xf32>
    %cst_58 = arith.constant dense<0.000000e+00> : vector<8x128xf32>
    %214 = tpu.matmul %208, %14, %cst_58 {dimension_numbers = #tpu.dot_dimension_numbers<[1], [0], [0], [1], [0, 0, 1, 1], [], []>} : vector<8x32xf32>, vector<32x128xf32>, vector<8x128xf32> -> vector<8x128xf32>
    %215 = arith.addf %213, %214 : vector<8x128xf32>
    %216 = vector.extract_strided_slice %215 {offsets = [0, 0], sizes = [8, 32], strides = [1, 1]} : vector<8x128xf32> to vector<8x32xf32>
    %217 = arith.negf %216 : vector<8x32xf32>
    %218 = math.exp %217 : vector<8x32xf32>
    %cst_59 = arith.constant 1.000000e+00 : f32
    %219 = vector.broadcast %cst_59 : f32 to vector<8x32xf32>
    %220 = arith.addf %219, %218 : vector<8x32xf32>
    %221 = arith.divf %219, %220 : vector<8x32xf32>
    %222 = vector.extract_strided_slice %215 {offsets = [0, 32], sizes = [8, 32], strides = [1, 1]} : vector<8x128xf32> to vector<8x32xf32>
    %223 = arith.negf %222 : vector<8x32xf32>
    %224 = math.exp %223 : vector<8x32xf32>
    %cst_60 = arith.constant 1.000000e+00 : f32
    %225 = vector.broadcast %cst_60 : f32 to vector<8x32xf32>
    %226 = arith.addf %225, %224 : vector<8x32xf32>
    %227 = arith.divf %225, %226 : vector<8x32xf32>
    %228 = vector.extract_strided_slice %215 {offsets = [0, 64], sizes = [8, 32], strides = [1, 1]} : vector<8x128xf32> to vector<8x32xf32>
    %229 = math.tanh %228 : vector<8x32xf32>
    %230 = vector.extract_strided_slice %215 {offsets = [0, 96], sizes = [8, 32], strides = [1, 1]} : vector<8x128xf32> to vector<8x32xf32>
    %231 = arith.negf %230 : vector<8x32xf32>
    %232 = math.exp %231 : vector<8x32xf32>
    %cst_61 = arith.constant 1.000000e+00 : f32
    %233 = vector.broadcast %cst_61 : f32 to vector<8x32xf32>
    %234 = arith.addf %233, %232 : vector<8x32xf32>
    %235 = arith.divf %233, %234 : vector<8x32xf32>
    %236 = arith.mulf %227, %206 : vector<8x32xf32>
    %237 = arith.mulf %221, %229 : vector<8x32xf32>
    %238 = arith.addf %236, %237 : vector<8x32xf32>
    %239 = math.tanh %238 : vector<8x32xf32>
    %240 = arith.mulf %235, %239 : vector<8x32xf32>
    %c7_i32 = arith.constant 7 : i32
    %c8_i32_62 = arith.constant 8 : i32
    %241 = arith.muli %c7_i32, %c8_i32_62 : i32
    %242 = arith.index_cast %241 : i32 to index
    %c0_63 = arith.constant 0 : index
    %243 = vector.load %arg6[%242, %c0_63] : memref<64x32xf32, #tpu.memory_space<vmem>>, vector<8x32xf32>
    tpu.vector_store %arg6[%242, %c0_63], %240 {strides = array<i32>} : memref<64x32xf32, #tpu.memory_space<vmem>>, vector<8x32xf32>,
    %244 = arith.index_cast %241 : i32 to index
    %c0_64 = arith.constant 0 : index
    %245 = vector.load %arg7[%244, %c0_64] : memref<64x128xf32, #tpu.memory_space<vmem>>, vector<8x128xf32>
    %cst_65 = arith.constant dense<0.000000e+00> : vector<8x128xf32>
    %246 = tpu.matmul %240, %14, %cst_65 {dimension_numbers = #tpu.dot_dimension_numbers<[1], [0], [0], [1], [0, 0, 1, 1], [], []>} : vector<8x32xf32>, vector<32x128xf32>, vector<8x128xf32> -> vector<8x128xf32>
    %247 = arith.addf %245, %246 : vector<8x128xf32>
    %248 = vector.extract_strided_slice %247 {offsets = [0, 0], sizes = [8, 32], strides = [1, 1]} : vector<8x128xf32> to vector<8x32xf32>
    %249 = arith.negf %248 : vector<8x32xf32>
    %250 = math.exp %249 : vector<8x32xf32>
    %cst_66 = arith.constant 1.000000e+00 : f32
    %251 = vector.broadcast %cst_66 : f32 to vector<8x32xf32>
    %252 = arith.addf %251, %250 : vector<8x32xf32>
    %253 = arith.divf %251, %252 : vector<8x32xf32>
    %254 = vector.extract_strided_slice %247 {offsets = [0, 32], sizes = [8, 32], strides = [1, 1]} : vector<8x128xf32> to vector<8x32xf32>
    %255 = arith.negf %254 : vector<8x32xf32>
    %256 = math.exp %255 : vector<8x32xf32>
    %cst_67 = arith.constant 1.000000e+00 : f32
    %257 = vector.broadcast %cst_67 : f32 to vector<8x32xf32>
    %258 = arith.addf %257, %256 : vector<8x32xf32>
    %259 = arith.divf %257, %258 : vector<8x32xf32>
    %260 = vector.extract_strided_slice %247 {offsets = [0, 64], sizes = [8, 32], strides = [1, 1]} : vector<8x128xf32> to vector<8x32xf32>
    %261 = math.tanh %260 : vector<8x32xf32>
    %262 = vector.extract_strided_slice %247 {offsets = [0, 96], sizes = [8, 32], strides = [1, 1]} : vector<8x128xf32> to vector<8x32xf32>
    %263 = arith.negf %262 : vector<8x32xf32>
    %264 = math.exp %263 : vector<8x32xf32>
    %cst_68 = arith.constant 1.000000e+00 : f32
    %265 = vector.broadcast %cst_68 : f32 to vector<8x32xf32>
    %266 = arith.addf %265, %264 : vector<8x32xf32>
    %267 = arith.divf %265, %266 : vector<8x32xf32>
    %268 = arith.mulf %259, %238 : vector<8x32xf32>
    %269 = arith.mulf %253, %261 : vector<8x32xf32>
    %270 = arith.addf %268, %269 : vector<8x32xf32>
    %271 = math.tanh %270 : vector<8x32xf32>
    %272 = arith.mulf %267, %271 : vector<8x32xf32>
    %c8_i32_69 = arith.constant 8 : i32
    %c0_70 = arith.constant 0 : index
    %c0_71 = arith.constant 0 : index
    %273 = vector.load %arg6[%c0_70, %c0_71] : memref<64x32xf32, #tpu.memory_space<vmem>>, vector<64x32xf32>
    %c0_72 = arith.constant 0 : index
    %c0_73 = arith.constant 0 : index
    %274 = vector.load %arg1[%c0_72, %c0_73] : memref<128x32xf32, #tpu.memory_space<vmem>>, vector<128x32xf32>
    %cst_74 = arith.constant dense<0.000000e+00> : vector<64x128xf32>
    %275 = tpu.matmul %273, %274, %cst_74 {dimension_numbers = #tpu.dot_dimension_numbers<[1], [1], [0], [0], [0, 0, 1, 0], [], []>} : vector<64x32xf32>, vector<128x32xf32>, vector<64x128xf32> -> vector<64x128xf32>
    %c0_75 = arith.constant 0 : index
    %c0_76 = arith.constant 0 : index
    %276 = vector.load %arg5[%c0_75, %c0_76] : memref<64x128xf32, #tpu.memory_space<vmem>>, vector<64x128xf32>
    tpu.vector_store %arg5[%c0_75, %c0_76], %275 {strides = array<i32>} : memref<64x128xf32, #tpu.memory_space<vmem>>, vector<64x128xf32>,
    return
  }
}

</mosaic_0001>

<llo_original>
// kernel: vvul_forward.1
$region0: #{vvul_forward.1}
  #allocation0 [shape = 'u32[]', space=smem, size = 0x4, offset = 0x4, fixed_abs, tag = 'smem constant byte address 0x4 - core index']
  #allocation1 [shape = 'u32[144,128]{1,0:T(1,128)}', space=vmem, size = 0x12000, scoped, tag = 'internal scratch']
  #allocation2 [shape = 'f32[64,32]{1,0:T(8,128)}', space=vmem, size = 0x8000, scoped, tag = 'scratch operand']
  #allocation3 [shape = 'f32[64,128]{1,0:T(8,128)}', space=vmem, size = 0x8000, scoped, tag = 'scratch operand']
  %s0 = inlined_call_operand.vmem [shape: s32[64,1], index: 0, kind: input, shape index: {}]
  %s1 = inlined_call_operand.vmem [shape: f32[128,32], index: 1, kind: input, shape index: {}]
  %s2 = inlined_call_operand.vmem [shape: f32[32,128], index: 2, kind: input, shape index: {}]
  %s3 = inlined_call_operand.vmem [shape: f32[32,128], index: 3, kind: input, shape index: {}]
  %s4 = inlined_call_operand.vmem [shape: f32[1,128], index: 4, kind: input, shape index: {}]
  %s5 = inlined_call_operand.hbm [shape: f32[64,128], index: 5, kind: output, shape index: {}]
  %s6 = sld [smem:[#allocation0]]
  $region30: #{vvul_forward.1} parent=0
    _
  %s8 = ssub.s32 1, %s6
  %s9 = scalar_select 0, %s8, %s6
  $region1: #{vvul_forward.1} parent=0
    #allocation4 [shape = 'u8[32768]{0}', space=vmem, size = 0x8000, scoped, tag = 'output window, operand 0, single buffered']
    #allocation5 [shape = 's32[1]{0}', space=sflag, size = 0x4, scoped, tag = 'scoped memory for vvul_forward.1']
    %10 = vsyncpa [#allocation5], 0
    // Predicated region
    $region2: #{vvul_forward.1} parent=1 // pred_check
      _
    $region3: #{vvul_forward.1} parent=1 // pred_check_branch
      %12 = sbr.rel (0) target = $region5
    $region4: #{vvul_forward.1} parent=1 // pred_region
      _
    $region5: #{vvul_forward.1} parent=1 // pred_fallthru
      _
    // Predicated region
    $region6: #{vvul_forward.1} parent=1 // pred_check
      _
    $region7: #{vvul_forward.1} parent=1 // pred_check_branch
      %14 = sbr.rel (0) target = $region9
    $region8: #{vvul_forward.1} parent=1 // pred_region
      _
    $region9: #{vvul_forward.1} parent=1 // pred_fallthru
      _
    // Predicated region
    $region10: #{vvul_forward.1} parent=1 // pred_check
      _
    $region11: #{vvul_forward.1} parent=1 // pred_check_branch
      %16 = sbr.rel (0) target = $region13
    $region12: #{vvul_forward.1} parent=1 // pred_region
      _
    $region13: #{vvul_forward.1} parent=1 // pred_fallthru
      _
    // Predicated region
    $region14: #{vvul_forward.1} parent=1 // pred_check
      _
    $region15: #{vvul_forward.1} parent=1 // pred_check_branch
      %18 = sbr.rel (0) target = $region17
    $region16: #{vvul_forward.1} parent=1 // pred_region
      _
    $region17: #{vvul_forward.1} parent=1 // pred_fallthru
      _
    // Predicated region
    $region18: #{vvul_forward.1} parent=1 // pred_check
      _
    $region19: #{vvul_forward.1} parent=1 // pred_check_branch
      %20 = sbr.rel (0) target = $region21
    $region20: #{vvul_forward.1} parent=1 // pred_region
      _
    $region21: #{vvul_forward.1} parent=1 // pred_fallthru
      _
    %v21 = vld [vmem:[%s0] sm:$0xff]
    %v22 = vld [vmem:[%s0 + $0x8] sm:$0xff]
    %v23 = vld [vmem:[%s0 + $0x10] sm:$0xff]
    %v24 = vld [vmem:[%s0 + $0x18] sm:$0xff]
    %v25 = vld [vmem:[%s0 + $0x20] sm:$0xff]
    %v26 = vld [vmem:[%s0 + $0x28] sm:$0xff]
    %v27 = vld [vmem:[%s0 + $0x30] sm:$0xff]
    %v28 = vld [vmem:[%s0 + $0x38] sm:$0xff]
    %v29 = vlaneseq
    %v30 = vand.u32 %v29, 127
    %31 = vset.pattern.permute.xlu0 0
    %32 = vperm.xlu0 %31, %v21
    %v33 = vpop.permute.xlu0 %32
    %34 = vset.pattern.permute.xlu0 0
    %35 = vperm.xlu0 %34, %v22
    %v36 = vpop.permute.xlu0 %35
    %37 = vset.pattern.permute.xlu0 0
    %38 = vperm.xlu0 %37, %v23
    %v39 = vpop.permute.xlu0 %38
    %40 = vset.pattern.permute.xlu0 0
    %41 = vperm.xlu0 %40, %v24
    %v42 = vpop.permute.xlu0 %41
    %43 = vset.pattern.permute.xlu0 0
    %44 = vperm.xlu0 %43, %v25
    %v45 = vpop.permute.xlu0 %44
    %46 = vset.pattern.permute.xlu0 0
    %47 = vperm.xlu0 %46, %v26
    %v48 = vpop.permute.xlu0 %47
    %49 = vset.pattern.permute.xlu0 0
    %50 = vperm.xlu0 %49, %v27
    %v51 = vpop.permute.xlu0 %50
    %52 = vset.pattern.permute.xlu0 0
    %53 = vperm.xlu0 %52, %v28
    %v54 = vpop.permute.xlu0 %53
    %vm55 = vcmp.eq.s32.totalorder %v30, %v33
    %vm56 = vcmp.eq.s32.totalorder %v30, %v36
    %vm57 = vcmp.eq.s32.totalorder %v30, %v39
    %vm58 = vcmp.eq.s32.totalorder %v30, %v42
    %vm59 = vcmp.eq.s32.totalorder %v30, %v45
    %vm60 = vcmp.eq.s32.totalorder %v30, %v48
    %vm61 = vcmp.eq.s32.totalorder %v30, %v51
    %vm62 = vcmp.eq.s32.totalorder %v30, %v54
    %v63 = vsel %vm55, 1, 0
    %v64 = vsel %vm56, 1, 0
    %v65 = vsel %vm57, 1, 0
    %v66 = vsel %vm58, 1, 0
    %v67 = vsel %vm59, 1, 0
    %v68 = vsel %vm60, 1, 0
    %v69 = vsel %vm61, 1, 0
    %v70 = vsel %vm62, 1, 0
    %v71 = vcvt.s32.f32 %v63
    %v72 = vcvt.s32.f32 %v64
    %v73 = vcvt.s32.f32 %v65
    %v74 = vcvt.s32.f32 %v66
    %v75 = vcvt.s32.f32 %v67
    %v76 = vcvt.s32.f32 %v68
    %v77 = vcvt.s32.f32 %v69
    %v78 = vcvt.s32.f32 %v70
    %v79 = vld [vmem:[%s1] sm:$0xff]
    %v80 = vld [vmem:[%s1 + $0x8] sm:$0xff]
    %v81 = vld [vmem:[%s1 + $0x10] sm:$0xff]
    %v82 = vld [vmem:[%s1 + $0x18] sm:$0xff]
    %v83 = vld [vmem:[%s1 + $0x20] sm:$0xff]
    %v84 = vld [vmem:[%s1 + $0x28] sm:$0xff]
    %v85 = vld [vmem:[%s1 + $0x30] sm:$0xff]
    %v86 = vld [vmem:[%s1 + $0x38] sm:$0xff]
    %v87 = vld [vmem:[%s1 + $0x40] sm:$0xff]
    %v88 = vld [vmem:[%s1 + $0x48] sm:$0xff]
    %v89 = vld [vmem:[%s1 + $0x50] sm:$0xff]
    %v90 = vld [vmem:[%s1 + $0x58] sm:$0xff]
    %v91 = vld [vmem:[%s1 + $0x60] sm:$0xff]
    %v92 = vld [vmem:[%s1 + $0x68] sm:$0xff]
    %v93 = vld [vmem:[%s1 + $0x70] sm:$0xff]
    %v94 = vld [vmem:[%s1 + $0x78] sm:$0xff]
    %95 = vmatprep.subr.mxu0 0.0
    %96 = vmatpush1.msra.mxu0 %v79
    %97 = vmatprep.subr.mxu0 0.0
    %98 = vmatpush1.msra.mxu0 %v80
    %99 = vmatprep.subr.mxu0 0.0
    %100 = vmatpush1.msra.mxu0 %v81
    %101 = vmatprep.subr.mxu0 0.0
    %102 = vmatpush1.msra.mxu0 %v82
    %103 = vmatprep.subr.mxu0 0.0
    %104 = vmatpush1.msra.mxu0 %v83
    %105 = vmatprep.subr.mxu0 0.0
    %106 = vmatpush1.msra.mxu0 %v84
    %107 = vmatprep.subr.mxu0 0.0
    %108 = vmatpush1.msra.mxu0 %v85
    %109 = vmatprep.subr.mxu0 0.0
    %110 = vmatpush1.msra.mxu0 %v86
    %111 = vmatprep.subr.mxu0 0.0
    %112 = vmatpush1.msra.mxu0 %v87
    %113 = vmatprep.subr.mxu0 0.0
    %114 = vmatpush1.msra.mxu0 %v88
    %115 = vmatprep.subr.mxu0 0.0
    %116 = vmatpush1.msra.mxu0 %v89
    %117 = vmatprep.subr.mxu0 0.0
    %118 = vmatpush1.msra.mxu0 %v90
    %119 = vmatprep.subr.mxu0 0.0
    %120 = vmatpush1.msra.mxu0 %v91
    %121 = vmatprep.subr.mxu0 0.0
    %122 = vmatpush1.msra.mxu0 %v92
    %123 = vmatprep.subr.mxu0 0.0
    %124 = vmatpush1.msra.mxu0 %v93
    %125 = vmatprep.subr.mxu0 0.0
    %126 = vmatpush1.msra.mxu0 %v94
    %127 = vmatprep.subr.mxu0 0.0
    %128 = vmatpush1.msra.mxu0 0.0
    %129 = vmatprep.subr.mxu0 0.0
    %130 = vmatpush1.msra.mxu0 0.0
    %131 = vmatprep.subr.mxu0 0.0
    %132 = vmatpush1.msra.mxu0 0.0
    %133 = vmatprep.subr.mxu0 0.0
    %134 = vmatpush1.msra.mxu0 0.0
    %135 = vmatprep.subr.mxu0 0.0
    %136 = vmatpush1.msra.mxu0 0.0
    %137 = vmatprep.subr.mxu0 0.0
    %138 = vmatpush1.msra.mxu0 0.0
    %139 = vmatprep.subr.mxu0 0.0
    %140 = vmatpush1.msra.mxu0 0.0
    %141 = vmatprep.subr.mxu0 0.0
    %142 = vmatpush1.msra.mxu0 0.0
    %143 = vmatprep.subr.mxu0 0.0
    %144 = vmatpush1.msra.mxu0 0.0
    %145 = vmatprep.subr.mxu0 0.0
    %146 = vmatpush1.msra.mxu0 0.0
    %147 = vmatprep.subr.mxu0 0.0
    %148 = vmatpush1.msra.mxu0 0.0
    %149 = vmatprep.subr.mxu0 0.0
    %150 = vmatpush1.msra.mxu0 0.0
    %151 = vmatprep.subr.mxu0 0.0
    %152 = vmatpush1.msra.mxu0 0.0
    %153 = vmatprep.subr.mxu0 0.0
    %154 = vmatpush1.msra.mxu0 0.0
    %155 = vmatprep.subr.mxu0 0.0
    %156 = vmatpush1.msra.mxu0 0.0
    %157 = vmatprep.subr.mxu0 0.0
    %158 = vmatpush1.msra.mxu0 0.0
    %159 = vmatprep.mubr.f32.mxu0 0.0
    %160 = vmatmul.mubr.f32.gmra.mrb[0].mxu0 %v71
    %v161 = vpop.f32.mrb[0].mxu0
    %v162 = vadd.f32 0.0, %v161
    %v163 = vpop.f32.mrb[0].mxu0
    %164 = vmatprep.mubr.f32.mxu0 0.0
    %165 = vmatmul.mubr.f32.gmra.mrb[0].mxu0 %v72
    %v166 = vpop.f32.mrb[0].mxu0
    %v167 = vadd.f32 0.0, %v166
    %v168 = vpop.f32.mrb[0].mxu0
    %169 = vmatprep.mubr.f32.mxu0 0.0
    %170 = vmatmul.mubr.f32.gmra.mrb[0].mxu0 %v73
    %v171 = vpop.f32.mrb[0].mxu0
    %v172 = vadd.f32 0.0, %v171
    %v173 = vpop.f32.mrb[0].mxu0
    %174 = vmatprep.mubr.f32.mxu0 0.0
    %175 = vmatmul.mubr.f32.gmra.mrb[0].mxu0 %v74
    %v176 = vpop.f32.mrb[0].mxu0
    %v177 = vadd.f32 0.0, %v176
    %v178 = vpop.f32.mrb[0].mxu0
    %179 = vmatprep.mubr.f32.mxu0 0.0
    %180 = vmatmul.mubr.f32.gmra.mrb[0].mxu0 %v75
    %v181 = vpop.f32.mrb[0].mxu0
    %v182 = vadd.f32 0.0, %v181
    %v183 = vpop.f32.mrb[0].mxu0
    %184 = vmatprep.mubr.f32.mxu0 0.0
    %185 = vmatmul.mubr.f32.gmra.mrb[0].mxu0 %v76
    %v186 = vpop.f32.mrb[0].mxu0
    %v187 = vadd.f32 0.0, %v186
    %v188 = vpop.f32.mrb[0].mxu0
    %189 = vmatprep.mubr.f32.mxu0 0.0
    %190 = vmatmul.mubr.f32.gmra.mrb[0].mxu0 %v77
    %v191 = vpop.f32.mrb[0].mxu0
    %v192 = vadd.f32 0.0, %v191
    %v193 = vpop.f32.mrb[0].mxu0
    %194 = vmatprep.mubr.f32.mxu0 0.0
    %195 = vmatmul.mubr.f32.gmra.mrb[0].mxu0 %v78
    %v196 = vpop.f32.mrb[0].mxu0
    %v197 = vadd.f32 0.0, %v196
    %v198 = vpop.f32.mrb[0].mxu0
    %199 = vdwg.mxu0
    %v200 = vld [vmem:[%s2] sm:$0xff]
    %v201 = vld [vmem:[%s2 + $0x8] sm:$0xff]
    %v202 = vld [vmem:[%s2 + $0x10] sm:$0xff]
    %v203 = vld [vmem:[%s2 + $0x18] sm:$0xff]
    %v204 = vld [vmem:[%s4] sm:$0x1]
    %v206 = vlaneseq
    %v207 = vshrl.u32 %v206, 7
    %v208 = vsub.s32 0, %v207
    %v209 = vrot.slane %v204, %v208
    %vm211 = vcmask 261120
    %v213 = vsel %vm211, %v162, 0
    %v216 = vsel %vm211, %v167, 0
    %v219 = vsel %vm211, %v172, 0
    %v222 = vsel %vm211, %v177, 0
    %v225 = vsel %vm211, %v182, 0
    %v228 = vsel %vm211, %v187, 0
    %v231 = vsel %vm211, %v192, 0
    %v234 = vsel %vm211, %v197, 0
    %236 = vmatprep.subr.mxu0 0.0
    %237 = vmatpush1.msra.mxu0 %v200
    %238 = vmatprep.subr.mxu0 0.0
    %239 = vmatpush1.msra.mxu0 %v201
    %240 = vmatprep.subr.mxu0 0.0
    %241 = vmatpush1.msra.mxu0 %v202
    %242 = vmatprep.subr.mxu0 0.0
    %243 = vmatpush1.msra.mxu0 %v203
    %244 = vmatprep.subr.mxu0 0.0
    %245 = vmatpush1.msra.mxu0 0.0
    %246 = vmatprep.subr.mxu0 0.0
    %247 = vmatpush1.msra.mxu0 0.0
    %248 = vmatprep.subr.mxu0 0.0
    %249 = vmatpush1.msra.mxu0 0.0
    %250 = vmatprep.subr.mxu0 0.0
    %251 = vmatpush1.msra.mxu0 0.0
    %252 = vmatprep.subr.mxu0 0.0
    %253 = vmatpush1.msra.mxu0 0.0
    %254 = vmatprep.subr.mxu0 0.0
    %255 = vmatpush1.msra.mxu0 0.0
    %256 = vmatprep.subr.mxu0 0.0
    %257 = vmatpush1.msra.mxu0 0.0
    %258 = vmatprep.subr.mxu0 0.0
    %259 = vmatpush1.msra.mxu0 0.0
    %260 = vmatprep.subr.mxu0 0.0
    %261 = vmatpush1.msra.mxu0 0.0
    %262 = vmatprep.subr.mxu0 0.0
    %263 = vmatpush1.msra.mxu0 0.0
    %264 = vmatprep.subr.mxu0 0.0
    %265 = vmatpush1.msra.mxu0 0.0
    %266 = vmatprep.subr.mxu0 0.0
    %267 = vmatpush1.msra.mxu0 0.0
    %268 = vmatprep.subr.mxu0 0.0
    %269 = vmatpush1.msra.mxu0 0.0
    %270 = vmatprep.subr.mxu0 0.0
    %271 = vmatpush1.msra.mxu0 0.0
    %272 = vmatprep.subr.mxu0 0.0
    %273 = vmatpush1.msra.mxu0 0.0
    %274 = vmatprep.subr.mxu0 0.0
    %275 = vmatpush1.msra.mxu0 0.0
    %276 = vmatprep.subr.mxu0 0.0
    %277 = vmatpush1.msra.mxu0 0.0
    %278 = vmatprep.subr.mxu0 0.0
    %279 = vmatpush1.msra.mxu0 0.0
    %280 = vmatprep.subr.mxu0 0.0
    %281 = vmatpush1.msra.mxu0 0.0
    %282 = vmatprep.subr.mxu0 0.0
    %283 = vmatpush1.msra.mxu0 0.0
    %284 = vmatprep.subr.mxu0 0.0
    %285 = vmatpush1.msra.mxu0 0.0
    %286 = vmatprep.subr.mxu0 0.0
    %287 = vmatpush1.msra.mxu0 0.0
    %288 = vmatprep.subr.mxu0 0.0
    %289 = vmatpush1.msra.mxu0 0.0
    %290 = vmatprep.subr.mxu0 0.0
    %291 = vmatpush1.msra.mxu0 0.0
    %292 = vmatprep.subr.mxu0 0.0
    %293 = vmatpush1.msra.mxu0 0.0
    %294 = vmatprep.subr.mxu0 0.0
    %295 = vmatpush1.msra.mxu0 0.0
    %296 = vmatprep.subr.mxu0 0.0
    %297 = vmatpush1.msra.mxu0 0.0
    %298 = vmatprep.subr.mxu0 0.0
    %299 = vmatpush1.msra.mxu0 0.0
    %300 = vmatprep.mubr.f32.mxu0 0.0
    %301 = vmatmul.mubr.f32.gmra.mrb[0].mxu0 %v213
    %v302 = vpop.f32.mrb[0].mxu0
    %v303 = vadd.f32 %v209, %v302
    %v304 = vpop.f32.mrb[0].mxu0
    %305 = vmatprep.mubr.f32.mxu0 0.0
    %306 = vmatmul.mubr.f32.gmra.mrb[0].mxu0 %v216
    %v307 = vpop.f32.mrb[0].mxu0
    %v308 = vadd.f32 %v209, %v307
    %v309 = vpop.f32.mrb[0].mxu0
    %310 = vmatprep.mubr.f32.mxu0 0.0
    %311 = vmatmul.mubr.f32.gmra.mrb[0].mxu0 %v219
    %v312 = vpop.f32.mrb[0].mxu0
    %v313 = vadd.f32 %v209, %v312
    %v314 = vpop.f32.mrb[0].mxu0
    %315 = vmatprep.mubr.f32.mxu0 0.0
    %316 = vmatmul.mubr.f32.gmra.mrb[0].mxu0 %v222
    %v317 = vpop.f32.mrb[0].mxu0
    %v318 = vadd.f32 %v209, %v317
    %v319 = vpop.f32.mrb[0].mxu0
    %320 = vmatprep.mubr.f32.mxu0 0.0
    %321 = vmatmul.mubr.f32.gmra.mrb[0].mxu0 %v225
    %v322 = vpop.f32.mrb[0].mxu0
    %v323 = vadd.f32 %v209, %v322
    %v324 = vpop.f32.mrb[0].mxu0
    %325 = vmatprep.mubr.f32.mxu0 0.0
    %326 = vmatmul.mubr.f32.gmra.mrb[0].mxu0 %v228
    %v327 = vpop.f32.mrb[0].mxu0
    %v328 = vadd.f32 %v209, %v327
    %v329 = vpop.f32.mrb[0].mxu0
    %330 = vmatprep.mubr.f32.mxu0 0.0
    %331 = vmatmul.mubr.f32.gmra.mrb[0].mxu0 %v231
    %v332 = vpop.f32.mrb[0].mxu0
    %v333 = vadd.f32 %v209, %v332
    %v334 = vpop.f32.mrb[0].mxu0
    %335 = vmatprep.mubr.f32.mxu0 0.0
    %336 = vmatmul.mubr.f32.gmra.mrb[0].mxu0 %v234
    %v337 = vpop.f32.mrb[0].mxu0
    %v338 = vadd.f32 %v209, %v337
    %v339 = vpop.f32.mrb[0].mxu0
    %340 = vdwg.mxu0
    %341 = vst [vmem:[#allocation3] sm:$0xff] %v303
    %342 = vst [vmem:[#allocation3 + $0x8] sm:$0xff] %v308
    %343 = vst [vmem:[#allocation3 + $0x10] sm:$0xff] %v313
    %344 = vst [vmem:[#allocation3 + $0x18] sm:$0xff] %v318
    %345 = vst [vmem:[#allocation3 + $0x20] sm:$0xff] %v323
    %346 = vst [vmem:[#allocation3 + $0x28] sm:$0xff] %v328
    %347 = vst [vmem:[#allocation3 + $0x30] sm:$0xff] %v333
    %348 = vst [vmem:[#allocation3 + $0x38] sm:$0xff] %v338
    %v349 = vld [vmem:[%s3] sm:$0xff]
    %v350 = vld [vmem:[%s3 + $0x8] sm:$0xff]
    %v351 = vld [vmem:[%s3 + $0x10] sm:$0xff]
    %v352 = vld [vmem:[%s3 + $0x18] sm:$0xff]
    %353 = vst.msk [vmem:[#allocation2] sm:$0xff] %vm211, 0.0
    %v354 = vld [vmem:[#allocation3] sm:$0xff]
    %v356 = vsel %vm211, 0.0, 0
    %358 = vmatprep.subr.mxu0 0.0
    %359 = vmatpush1.msra.mxu0 %v349
    %360 = vmatprep.subr.mxu0 0.0
    %361 = vmatpush1.msra.mxu0 %v350
    %362 = vmatprep.subr.mxu0 0.0
    %363 = vmatpush1.msra.mxu0 %v351
    %364 = vmatprep.subr.mxu0 0.0
    %365 = vmatpush1.msra.mxu0 %v352
    %366 = vmatprep.subr.mxu0 0.0
    %367 = vmatpush1.msra.mxu0 0.0
    %368 = vmatprep.subr.mxu0 0.0
    %369 = vmatpush1.msra.mxu0 0.0
    %370 = vmatprep.subr.mxu0 0.0
    %371 = vmatpush1.msra.mxu0 0.0
    %372 = vmatprep.subr.mxu0 0.0
    %373 = vmatpush1.msra.mxu0 0.0
    %374 = vmatprep.subr.mxu0 0.0
    %375 = vmatpush1.msra.mxu0 0.0
    %376 = vmatprep.subr.mxu0 0.0
    %377 = vmatpush1.msra.mxu0 0.0
    %378 = vmatprep.subr.mxu0 0.0
    %379 = vmatpush1.msra.mxu0 0.0
    %380 = vmatprep.subr.mxu0 0.0
    %381 = vmatpush1.msra.mxu0 0.0
    %382 = vmatprep.subr.mxu0 0.0
    %383 = vmatpush1.msra.mxu0 0.0
    %384 = vmatprep.subr.mxu0 0.0
    %385 = vmatpush1.msra.mxu0 0.0
    %386 = vmatprep.subr.mxu0 0.0
    %387 = vmatpush1.msra.mxu0 0.0
    %388 = vmatprep.subr.mxu0 0.0
    %389 = vmatpush1.msra.mxu0 0.0
    %390 = vmatprep.subr.mxu0 0.0
    %391 = vmatpush1.msra.mxu0 0.0
    %392 = vmatprep.subr.mxu0 0.0
    %393 = vmatpush1.msra.mxu0 0.0
    %394 = vmatprep.subr.mxu0 0.0
    %395 = vmatpush1.msra.mxu0 0.0
    %396 = vmatprep.subr.mxu0 0.0
    %397 = vmatpush1.msra.mxu0 0.0
    %398 = vmatprep.subr.mxu0 0.0
    %399 = vmatpush1.msra.mxu0 0.0
    %400 = vmatprep.subr.mxu0 0.0
    %401 = vmatpush1.msra.mxu0 0.0
    %402 = vmatprep.subr.mxu0 0.0
    %403 = vmatpush1.msra.mxu0 0.0
    %404 = vmatprep.subr.mxu0 0.0
    %405 = vmatpush1.msra.mxu0 0.0
    %406 = vmatprep.subr.mxu0 0.0
    %407 = vmatpush1.msra.mxu0 0.0
    %408 = vmatprep.subr.mxu0 0.0
    %409 = vmatpush1.msra.mxu0 0.0
    %410 = vmatprep.subr.mxu0 0.0
    %411 = vmatpush1.msra.mxu0 0.0
    %412 = vmatprep.subr.mxu0 0.0
    %413 = vmatpush1.msra.mxu0 0.0
    %414 = vmatprep.subr.mxu0 0.0
    %415 = vmatpush1.msra.mxu0 0.0
    %416 = vmatprep.subr.mxu0 0.0
    %417 = vmatpush1.msra.mxu0 0.0
    %418 = vmatprep.subr.mxu0 0.0
    %419 = vmatpush1.msra.mxu0 0.0
    %420 = vmatprep.subr.mxu0 0.0
    %421 = vmatpush1.msra.mxu0 0.0
    %422 = vmatprep.mubr.f32.mxu0 0.0
    %423 = vmatmul.mubr.f32.gmra.mrb[0].mxu0 %v356
    %v424 = vpop.f32.mrb[0].mxu0
    %v425 = vadd.f32 0.0, %v424
    %v426 = vpop.f32.mrb[0].mxu0
    %427 = vdwg.mxu0
    %v428 = vadd.f32 %v354, %v425
    %v429 = vxor.u32 %v428, 2147483648
    %v430 = vmul.f32 %v429, 1.442695
    %v431 = vpow.pop %v430
    %v432 = vadd.f32 %v431, 1.0
    %v433 = vrcp.pop %v432
    %v434 = vmul.f32 1.0, %v433
    %v435 = vtanh.pop %v428
    %v436 = vmul.f32 %v434, 0.0
    %438 = vrot.lane.b32.xlu0 %v435, 64
    %v439 = vpop.permute.xlu0 %438
    %v441 = vmul.f32 %v434, %v439
    %443 = vrot.lane.b32.xlu0 %v441, 32
    %v444 = vpop.permute.xlu0 %443
    %v446 = vadd.f32 %v436, %v444
    %v447 = vtanh.pop %v446
    %449 = vrot.lane.b32.xlu0 %v447, 64
    %v450 = vpop.permute.xlu0 %449
    %v452 = vmul.f32 %v434, %v450
    %454 = vrot.lane.b32.xlu0 %v452, 32
    %v455 = vpop.permute.xlu0 %454
    %457 = vst.msk [vmem:[#allocation2 + $0x8] sm:$0xff] %vm211, %v455
    %v458 = vld [vmem:[#allocation3 + $0x8] sm:$0xff]
    %v459 = vsel %vm211, %v455, 0
    %461 = vmatprep.subr.mxu0 0.0
    %462 = vmatpush1.msra.mxu0 %v349
    %463 = vmatprep.subr.mxu0 0.0
    %464 = vmatpush1.msra.mxu0 %v350
    %465 = vmatprep.subr.mxu0 0.0
    %466 = vmatpush1.msra.mxu0 %v351
    %467 = vmatprep.subr.mxu0 0.0
    %468 = vmatpush1.msra.mxu0 %v352
    %469 = vmatprep.subr.mxu0 0.0
    %470 = vmatpush1.msra.mxu0 0.0
    %471 = vmatprep.subr.mxu0 0.0
    %472 = vmatpush1.msra.mxu0 0.0
    %473 = vmatprep.subr.mxu0 0.0
    %474 = vmatpush1.msra.mxu0 0.0
    %475 = vmatprep.subr.mxu0 0.0
    %476 = vmatpush1.msra.mxu0 0.0
    %477 = vmatprep.subr.mxu0 0.0
    %478 = vmatpush1.msra.mxu0 0.0
    %479 = vmatprep.subr.mxu0 0.0
    %480 = vmatpush1.msra.mxu0 0.0
    %481 = vmatprep.subr.mxu0 0.0
    %482 = vmatpush1.msra.mxu0 0.0
    %483 = vmatprep.subr.mxu0 0.0
    %484 = vmatpush1.msra.mxu0 0.0
    %485 = vmatprep.subr.mxu0 0.0
    %486 = vmatpush1.msra.mxu0 0.0
    %487 = vmatprep.subr.mxu0 0.0
    %488 = vmatpush1.msra.mxu0 0.0
    %489 = vmatprep.subr.mxu0 0.0
    %490 = vmatpush1.msra.mxu0 0.0
    %491 = vmatprep.subr.mxu0 0.0
    %492 = vmatpush1.msra.mxu0 0.0
    %493 = vmatprep.subr.mxu0 0.0
    %494 = vmatpush1.msra.mxu0 0.0
    %495 = vmatprep.subr.mxu0 0.0
    %496 = vmatpush1.msra.mxu0 0.0
    %497 = vmatprep.subr.mxu0 0.0
    %498 = vmatpush1.msra.mxu0 0.0
    %499 = vmatprep.subr.mxu0 0.0
    %500 = vmatpush1.msra.mxu0 0.0
    %501 = vmatprep.subr.mxu0 0.0
    %502 = vmatpush1.msra.mxu0 0.0
    %503 = vmatprep.subr.mxu0 0.0
    %504 = vmatpush1.msra.mxu0 0.0
    %505 = vmatprep.subr.mxu0 0.0
    %506 = vmatpush1.msra.mxu0 0.0
    %507 = vmatprep.subr.mxu0 0.0
    %508 = vmatpush1.msra.mxu0 0.0
    %509 = vmatprep.subr.mxu0 0.0
    %510 = vmatpush1.msra.mxu0 0.0
    %511 = vmatprep.subr.mxu0 0.0
    %512 = vmatpush1.msra.mxu0 0.0
    %513 = vmatprep.subr.mxu0 0.0
    %514 = vmatpush1.msra.mxu0 0.0
    %515 = vmatprep.subr.mxu0 0.0
    %516 = vmatpush1.msra.mxu0 0.0
    %517 = vmatprep.subr.mxu0 0.0
    %518 = vmatpush1.msra.mxu0 0.0
    %519 = vmatprep.subr.mxu0 0.0
    %520 = vmatpush1.msra.mxu0 0.0
    %521 = vmatprep.subr.mxu0 0.0
    %522 = vmatpush1.msra.mxu0 0.0
    %523 = vmatprep.subr.mxu0 0.0
    %524 = vmatpush1.msra.mxu0 0.0
    %525 = vmatprep.mubr.f32.mxu0 0.0
    %526 = vmatmul.mubr.f32.gmra.mrb[0].mxu0 %v459
    %v527 = vpop.f32.mrb[0].mxu0
    %v528 = vadd.f32 0.0, %v527
    %v529 = vpop.f32.mrb[0].mxu0
    %530 = vdwg.mxu0
    %v531 = vadd.f32 %v458, %v528
    %v532 = vxor.u32 %v531, 2147483648
    %v533 = vmul.f32 %v532, 1.442695
    %v534 = vpow.pop %v533
    %v535 = vadd.f32 %v534, 1.0
    %v536 = vrcp.pop %v535
    %v537 = vmul.f32 1.0, %v536
    %v538 = vtanh.pop %v531
    %v539 = vmul.f32 %v537, %v446
    %541 = vrot.lane.b32.xlu0 %v538, 64
    %v542 = vpop.permute.xlu0 %541
    %v544 = vmul.f32 %v537, %v542
    %546 = vrot.lane.b32.xlu0 %v544, 32
    %v547 = vpop.permute.xlu0 %546
    %v549 = vadd.f32 %v539, %v547
    %v550 = vtanh.pop %v549
    %552 = vrot.lane.b32.xlu0 %v550, 64
    %v553 = vpop.permute.xlu0 %552
    %v555 = vmul.f32 %v537, %v553
    %557 = vrot.lane.b32.xlu0 %v555, 32
    %v558 = vpop.permute.xlu0 %557
    %560 = vst.msk [vmem:[#allocation2 + $0x10] sm:$0xff] %vm211, %v558
    %v561 = vld [vmem:[#allocation3 + $0x10] sm:$0xff]
    %v562 = vsel %vm211, %v558, 0
    %564 = vmatprep.subr.mxu0 0.0
    %565 = vmatpush1.msra.mxu0 %v349
    %566 = vmatprep.subr.mxu0 0.0
    %567 = vmatpush1.msra.mxu0 %v350
    %568 = vmatprep.subr.mxu0 0.0
    %569 = vmatpush1.msra.mxu0 %v351
    %570 = vmatprep.subr.mxu0 0.0
    %571 = vmatpush1.msra.mxu0 %v352
    %572 = vmatprep.subr.mxu0 0.0
    %573 = vmatpush1.msra.mxu0 0.0
    %574 = vmatprep.subr.mxu0 0.0
    %575 = vmatpush1.msra.mxu0 0.0
    %576 = vmatprep.subr.mxu0 0.0
    %577 = vmatpush1.msra.mxu0 0.0
    %578 = vmatprep.subr.mxu0 0.0
    %579 = vmatpush1.msra.mxu0 0.0
    %580 = vmatprep.subr.mxu0 0.0
    %581 = vmatpush1.msra.mxu0 0.0
    %582 = vmatprep.subr.mxu0 0.0
    %583 = vmatpush1.msra.mxu0 0.0
    %584 = vmatprep.subr.mxu0 0.0
    %585 = vmatpush1.msra.mxu0 0.0
    %586 = vmatprep.subr.mxu0 0.0
    %587 = vmatpush1.msra.mxu0 0.0
    %588 = vmatprep.subr.mxu0 0.0
    %589 = vmatpush1.msra.mxu0 0.0
    %590 = vmatprep.subr.mxu0 0.0
    %591 = vmatpush1.msra.mxu0 0.0
    %592 = vmatprep.subr.mxu0 0.0
    %593 = vmatpush1.msra.mxu0 0.0
    %594 = vmatprep.subr.mxu0 0.0
    %595 = vmatpush1.msra.mxu0 0.0
    %596 = vmatprep.subr.mxu0 0.0
    %597 = vmatpush1.msra.mxu0 0.0
    %598 = vmatprep.subr.mxu0 0.0
    %599 = vmatpush1.msra.mxu0 0.0
    %600 = vmatprep.subr.mxu0 0.0
    %601 = vmatpush1.msra.mxu0 0.0
    %602 = vmatprep.subr.mxu0 0.0
    %603 = vmatpush1.msra.mxu0 0.0
    %604 = vmatprep.subr.mxu0 0.0
    %605 = vmatpush1.msra.mxu0 0.0
    %606 = vmatprep.subr.mxu0 0.0
    %607 = vmatpush1.msra.mxu0 0.0
    %608 = vmatprep.subr.mxu0 0.0
    %609 = vmatpush1.msra.mxu0 0.0
    %610 = vmatprep.subr.mxu0 0.0
    %611 = vmatpush1.msra.mxu0 0.0
    %612 = vmatprep.subr.mxu0 0.0
    %613 = vmatpush1.msra.mxu0 0.0
    %614 = vmatprep.subr.mxu0 0.0
    %615 = vmatpush1.msra.mxu0 0.0
    %616 = vmatprep.subr.mxu0 0.0
    %617 = vmatpush1.msra.mxu0 0.0
    %618 = vmatprep.subr.mxu0 0.0
    %619 = vmatpush1.msra.mxu0 0.0
    %620 = vmatprep.subr.mxu0 0.0
    %621 = vmatpush1.msra.mxu0 0.0
    %622 = vmatprep.subr.mxu0 0.0
    %623 = vmatpush1.msra.mxu0 0.0
    %624 = vmatprep.subr.mxu0 0.0
    %625 = vmatpush1.msra.mxu0 0.0
    %626 = vmatprep.subr.mxu0 0.0
    %627 = vmatpush1.msra.mxu0 0.0
    %628 = vmatprep.mubr.f32.mxu0 0.0
    %629 = vmatmul.mubr.f32.gmra.mrb[0].mxu0 %v562
    %v630 = vpop.f32.mrb[0].mxu0
    %v631 = vadd.f32 0.0, %v630
    %v632 = vpop.f32.mrb[0].mxu0
    %633 = vdwg.mxu0
    %v634 = vadd.f32 %v561, %v631
    %v635 = vxor.u32 %v634, 2147483648
    %v636 = vmul.f32 %v635, 1.442695
    %v637 = vpow.pop %v636
    %v638 = vadd.f32 %v637, 1.0
    %v639 = vrcp.pop %v638
    %v640 = vmul.f32 1.0, %v639
    %v641 = vtanh.pop %v634
    %v642 = vmul.f32 %v640, %v549
    %644 = vrot.lane.b32.xlu0 %v641, 64
    %v645 = vpop.permute.xlu0 %644
    %v647 = vmul.f32 %v640, %v645
    %649 = vrot.lane.b32.xlu0 %v647, 32
    %v650 = vpop.permute.xlu0 %649
    %v652 = vadd.f32 %v642, %v650
    %v653 = vtanh.pop %v652
    %655 = vrot.lane.b32.xlu0 %v653, 64
    %v656 = vpop.permute.xlu0 %655
    %v658 = vmul.f32 %v640, %v656
    %660 = vrot.lane.b32.xlu0 %v658, 32
    %v661 = vpop.permute.xlu0 %660
    %663 = vst.msk [vmem:[#allocation2 + $0x18] sm:$0xff] %vm211, %v661
    %v664 = vld [vmem:[#allocation3 + $0x18] sm:$0xff]
    %v665 = vsel %vm211, %v661, 0
    %667 = vmatprep.subr.mxu0 0.0
    %668 = vmatpush1.msra.mxu0 %v349
    %669 = vmatprep.subr.mxu0 0.0
    %670 = vmatpush1.msra.mxu0 %v350
    %671 = vmatprep.subr.mxu0 0.0
    %672 = vmatpush1.msra.mxu0 %v351
    %673 = vmatprep.subr.mxu0 0.0
    %674 = vmatpush1.msra.mxu0 %v352
    %675 = vmatprep.subr.mxu0 0.0
    %676 = vmatpush1.msra.mxu0 0.0
    %677 = vmatprep.subr.mxu0 0.0
    %678 = vmatpush1.msra.mxu0 0.0
    %679 = vmatprep.subr.mxu0 0.0
    %680 = vmatpush1.msra.mxu0 0.0
    %681 = vmatprep.subr.mxu0 0.0
    %682 = vmatpush1.msra.mxu0 0.0
    %683 = vmatprep.subr.mxu0 0.0
    %684 = vmatpush1.msra.mxu0 0.0
    %685 = vmatprep.subr.mxu0 0.0
    %686 = vmatpush1.msra.mxu0 0.0
    %687 = vmatprep.subr.mxu0 0.0
    %688 = vmatpush1.msra.mxu0 0.0
    %689 = vmatprep.subr.mxu0 0.0
    %690 = vmatpush1.msra.mxu0 0.0
    %691 = vmatprep.subr.mxu0 0.0
    %692 = vmatpush1.msra.mxu0 0.0
    %693 = vmatprep.subr.mxu0 0.0
    %694 = vmatpush1.msra.mxu0 0.0
    %695 = vmatprep.subr.mxu0 0.0
    %696 = vmatpush1.msra.mxu0 0.0
    %697 = vmatprep.subr.mxu0 0.0
    %698 = vmatpush1.msra.mxu0 0.0
    %699 = vmatprep.subr.mxu0 0.0
    %700 = vmatpush1.msra.mxu0 0.0
    %701 = vmatprep.subr.mxu0 0.0
    %702 = vmatpush1.msra.mxu0 0.0
    %703 = vmatprep.subr.mxu0 0.0
    %704 = vmatpush1.msra.mxu0 0.0
    %705 = vmatprep.subr.mxu0 0.0
    %706 = vmatpush1.msra.mxu0 0.0
    %707 = vmatprep.subr.mxu0 0.0
    %708 = vmatpush1.msra.mxu0 0.0
    %709 = vmatprep.subr.mxu0 0.0
    %710 = vmatpush1.msra.mxu0 0.0
    %711 = vmatprep.subr.mxu0 0.0
    %712 = vmatpush1.msra.mxu0 0.0
    %713 = vmatprep.subr.mxu0 0.0
    %714 = vmatpush1.msra.mxu0 0.0
    %715 = vmatprep.subr.mxu0 0.0
    %716 = vmatpush1.msra.mxu0 0.0
    %717 = vmatprep.subr.mxu0 0.0
    %718 = vmatpush1.msra.mxu0 0.0
    %719 = vmatprep.subr.mxu0 0.0
    %720 = vmatpush1.msra.mxu0 0.0
    %721 = vmatprep.subr.mxu0 0.0
    %722 = vmatpush1.msra.mxu0 0.0
    %723 = vmatprep.subr.mxu0 0.0
    %724 = vmatpush1.msra.mxu0 0.0
    %725 = vmatprep.subr.mxu0 0.0
    %726 = vmatpush1.msra.mxu0 0.0
    %727 = vmatprep.subr.mxu0 0.0
    %728 = vmatpush1.msra.mxu0 0.0
    %729 = vmatprep.subr.mxu0 0.0
    %730 = vmatpush1.msra.mxu0 0.0
    %731 = vmatprep.mubr.f32.mxu0 0.0
    %732 = vmatmul.mubr.f32.gmra.mrb[0].mxu0 %v665
    %v733 = vpop.f32.mrb[0].mxu0
    %v734 = vadd.f32 0.0, %v733
    %v735 = vpop.f32.mrb[0].mxu0
    %736 = vdwg.mxu0
    %v737 = vadd.f32 %v664, %v734
    %v738 = vxor.u32 %v737, 2147483648
    %v739 = vmul.f32 %v738, 1.442695
    %v740 = vpow.pop %v739
    %v741 = vadd.f32 %v740, 1.0
    %v742 = vrcp.pop %v741
    %v743 = vmul.f32 1.0, %v742
    %v744 = vtanh.pop %v737
    %v745 = vmul.f32 %v743, %v652
    %747 = vrot.lane.b32.xlu0 %v744, 64
    %v748 = vpop.permute.xlu0 %747
    %v750 = vmul.f32 %v743, %v748
    %752 = vrot.lane.b32.xlu0 %v750, 32
    %v753 = vpop.permute.xlu0 %752
    %v755 = vadd.f32 %v745, %v753
    %v756 = vtanh.pop %v755
    %758 = vrot.lane.b32.xlu0 %v756, 64
    %v759 = vpop.permute.xlu0 %758
    %v761 = vmul.f32 %v743, %v759
    %763 = vrot.lane.b32.xlu0 %v761, 32
    %v764 = vpop.permute.xlu0 %763
    %766 = vst.msk [vmem:[#allocation2 + $0x20] sm:$0xff] %vm211, %v764
    %v767 = vld [vmem:[#allocation3 + $0x20] sm:$0xff]
    %v768 = vsel %vm211, %v764, 0
    %770 = vmatprep.subr.mxu0 0.0
    %771 = vmatpush1.msra.mxu0 %v349
    %772 = vmatprep.subr.mxu0 0.0
    %773 = vmatpush1.msra.mxu0 %v350
    %774 = vmatprep.subr.mxu0 0.0
    %775 = vmatpush1.msra.mxu0 %v351
    %776 = vmatprep.subr.mxu0 0.0
    %777 = vmatpush1.msra.mxu0 %v352
    %778 = vmatprep.subr.mxu0 0.0
    %779 = vmatpush1.msra.mxu0 0.0
    %780 = vmatprep.subr.mxu0 0.0
    %781 = vmatpush1.msra.mxu0 0.0
    %782 = vmatprep.subr.mxu0 0.0
    %783 = vmatpush1.msra.mxu0 0.0
    %784 = vmatprep.subr.mxu0 0.0
    %785 = vmatpush1.msra.mxu0 0.0
    %786 = vmatprep.subr.mxu0 0.0
    %787 = vmatpush1.msra.mxu0 0.0
    %788 = vmatprep.subr.mxu0 0.0
    %789 = vmatpush1.msra.mxu0 0.0
    %790 = vmatprep.subr.mxu0 0.0
    %791 = vmatpush1.msra.mxu0 0.0
    %792 = vmatprep.subr.mxu0 0.0
    %793 = vmatpush1.msra.mxu0 0.0
    %794 = vmatprep.subr.mxu0 0.0
    %795 = vmatpush1.msra.mxu0 0.0
    %796 = vmatprep.subr.mxu0 0.0
    %797 = vmatpush1.msra.mxu0 0.0
    %798 = vmatprep.subr.mxu0 0.0
    %799 = vmatpush1.msra.mxu0 0.0
    %800 = vmatprep.subr.mxu0 0.0
    %801 = vmatpush1.msra.mxu0 0.0
    %802 = vmatprep.subr.mxu0 0.0
    %803 = vmatpush1.msra.mxu0 0.0
    %804 = vmatprep.subr.mxu0 0.0
    %805 = vmatpush1.msra.mxu0 0.0
    %806 = vmatprep.subr.mxu0 0.0
    %807 = vmatpush1.msra.mxu0 0.0
    %808 = vmatprep.subr.mxu0 0.0
    %809 = vmatpush1.msra.mxu0 0.0
    %810 = vmatprep.subr.mxu0 0.0
    %811 = vmatpush1.msra.mxu0 0.0
    %812 = vmatprep.subr.mxu0 0.0
    %813 = vmatpush1.msra.mxu0 0.0
    %814 = vmatprep.subr.mxu0 0.0
    %815 = vmatpush1.msra.mxu0 0.0
    %816 = vmatprep.subr.mxu0 0.0
    %817 = vmatpush1.msra.mxu0 0.0
    %818 = vmatprep.subr.mxu0 0.0
    %819 = vmatpush1.msra.mxu0 0.0
    %820 = vmatprep.subr.mxu0 0.0
    %821 = vmatpush1.msra.mxu0 0.0
    %822 = vmatprep.subr.mxu0 0.0
    %823 = vmatpush1.msra.mxu0 0.0
    %824 = vmatprep.subr.mxu0 0.0
    %825 = vmatpush1.msra.mxu0 0.0
    %826 = vmatprep.subr.mxu0 0.0
    %827 = vmatpush1.msra.mxu0 0.0
    %828 = vmatprep.subr.mxu0 0.0
    %829 = vmatpush1.msra.mxu0 0.0
    %830 = vmatprep.subr.mxu0 0.0
    %831 = vmatpush1.msra.mxu0 0.0
    %832 = vmatprep.subr.mxu0 0.0
    %833 = vmatpush1.msra.mxu0 0.0
    %834 = vmatprep.mubr.f32.mxu0 0.0
    %835 = vmatmul.mubr.f32.gmra.mrb[0].mxu0 %v768
    %v836 = vpop.f32.mrb[0].mxu0
    %v837 = vadd.f32 0.0, %v836
    %v838 = vpop.f32.mrb[0].mxu0
    %839 = vdwg.mxu0
    %v840 = vadd.f32 %v767, %v837
    %v841 = vxor.u32 %v840, 2147483648
    %v842 = vmul.f32 %v841, 1.442695
    %v843 = vpow.pop %v842
    %v844 = vadd.f32 %v843, 1.0
    %v845 = vrcp.pop %v844
    %v846 = vmul.f32 1.0, %v845
    %v847 = vtanh.pop %v840
    %v848 = vmul.f32 %v846, %v755
    %850 = vrot.lane.b32.xlu0 %v847, 64
    %v851 = vpop.permute.xlu0 %850
    %v853 = vmul.f32 %v846, %v851
    %855 = vrot.lane.b32.xlu0 %v853, 32
    %v856 = vpop.permute.xlu0 %855
    %v858 = vadd.f32 %v848, %v856
    %v859 = vtanh.pop %v858
    %861 = vrot.lane.b32.xlu0 %v859, 64
    %v862 = vpop.permute.xlu0 %861
    %v864 = vmul.f32 %v846, %v862
    %866 = vrot.lane.b32.xlu0 %v864, 32
    %v867 = vpop.permute.xlu0 %866
    %869 = vst.msk [vmem:[#allocation2 + $0x28] sm:$0xff] %vm211, %v867
    %v870 = vld [vmem:[#allocation3 + $0x28] sm:$0xff]
    %v871 = vsel %vm211, %v867, 0
    %873 = vmatprep.subr.mxu0 0.0
    %874 = vmatpush1.msra.mxu0 %v349
    %875 = vmatprep.subr.mxu0 0.0
    %876 = vmatpush1.msra.mxu0 %v350
    %877 = vmatprep.subr.mxu0 0.0
    %878 = vmatpush1.msra.mxu0 %v351
    %879 = vmatprep.subr.mxu0 0.0
    %880 = vmatpush1.msra.mxu0 %v352
    %881 = vmatprep.subr.mxu0 0.0
    %882 = vmatpush1.msra.mxu0 0.0
    %883 = vmatprep.subr.mxu0 0.0
    %884 = vmatpush1.msra.mxu0 0.0
    %885 = vmatprep.subr.mxu0 0.0
    %886 = vmatpush1.msra.mxu0 0.0
    %887 = vmatprep.subr.mxu0 0.0
    %888 = vmatpush1.msra.mxu0 0.0
    %889 = vmatprep.subr.mxu0 0.0
    %890 = vmatpush1.msra.mxu0 0.0
    %891 = vmatprep.subr.mxu0 0.0
    %892 = vmatpush1.msra.mxu0 0.0
    %893 = vmatprep.subr.mxu0 0.0
    %894 = vmatpush1.msra.mxu0 0.0
    %895 = vmatprep.subr.mxu0 0.0
    %896 = vmatpush1.msra.mxu0 0.0
    %897 = vmatprep.subr.mxu0 0.0
    %898 = vmatpush1.msra.mxu0 0.0
    %899 = vmatprep.subr.mxu0 0.0
    %900 = vmatpush1.msra.mxu0 0.0
    %901 = vmatprep.subr.mxu0 0.0
    %902 = vmatpush1.msra.mxu0 0.0
    %903 = vmatprep.subr.mxu0 0.0
    %904 = vmatpush1.msra.mxu0 0.0
    %905 = vmatprep.subr.mxu0 0.0
    %906 = vmatpush1.msra.mxu0 0.0
    %907 = vmatprep.subr.mxu0 0.0
    %908 = vmatpush1.msra.mxu0 0.0
    %909 = vmatprep.subr.mxu0 0.0
    %910 = vmatpush1.msra.mxu0 0.0
    %911 = vmatprep.subr.mxu0 0.0
    %912 = vmatpush1.msra.mxu0 0.0
    %913 = vmatprep.subr.mxu0 0.0
    %914 = vmatpush1.msra.mxu0 0.0
    %915 = vmatprep.subr.mxu0 0.0
    %916 = vmatpush1.msra.mxu0 0.0
    %917 = vmatprep.subr.mxu0 0.0
    %918 = vmatpush1.msra.mxu0 0.0
    %919 = vmatprep.subr.mxu0 0.0
    %920 = vmatpush1.msra.mxu0 0.0
    %921 = vmatprep.subr.mxu0 0.0
    %922 = vmatpush1.msra.mxu0 0.0
    %923 = vmatprep.subr.mxu0 0.0
    %924 = vmatpush1.msra.mxu0 0.0
    %925 = vmatprep.subr.mxu0 0.0
    %926 = vmatpush1.msra.mxu0 0.0
    %927 = vmatprep.subr.mxu0 0.0
    %928 = vmatpush1.msra.mxu0 0.0
    %929 = vmatprep.subr.mxu0 0.0
    %930 = vmatpush1.msra.mxu0 0.0
    %931 = vmatprep.subr.mxu0 0.0
    %932 = vmatpush1.msra.mxu0 0.0
    %933 = vmatprep.subr.mxu0 0.0
    %934 = vmatpush1.msra.mxu0 0.0
    %935 = vmatprep.subr.mxu0 0.0
    %936 = vmatpush1.msra.mxu0 0.0
    %937 = vmatprep.mubr.f32.mxu0 0.0
    %938 = vmatmul.mubr.f32.gmra.mrb[0].mxu0 %v871
    %v939 = vpop.f32.mrb[0].mxu0
    %v940 = vadd.f32 0.0, %v939
    %v941 = vpop.f32.mrb[0].mxu0
    %942 = vdwg.mxu0
    %v943 = vadd.f32 %v870, %v940
    %v944 = vxor.u32 %v943, 2147483648
    %v945 = vmul.f32 %v944, 1.442695
    %v946 = vpow.pop %v945
    %v947 = vadd.f32 %v946, 1.0
    %v948 = vrcp.pop %v947
    %v949 = vmul.f32 1.0, %v948
    %v950 = vtanh.pop %v943
    %v951 = vmul.f32 %v949, %v858
    %953 = vrot.lane.b32.xlu0 %v950, 64
    %v954 = vpop.permute.xlu0 %953
    %v956 = vmul.f32 %v949, %v954
    %958 = vrot.lane.b32.xlu0 %v956, 32
    %v959 = vpop.permute.xlu0 %958
    %v961 = vadd.f32 %v951, %v959
    %v962 = vtanh.pop %v961
    %964 = vrot.lane.b32.xlu0 %v962, 64
    %v965 = vpop.permute.xlu0 %964
    %v967 = vmul.f32 %v949, %v965
    %969 = vrot.lane.b32.xlu0 %v967, 32
    %v970 = vpop.permute.xlu0 %969
    %972 = vst.msk [vmem:[#allocation2 + $0x30] sm:$0xff] %vm211, %v970
    %v973 = vld [vmem:[#allocation3 + $0x30] sm:$0xff]
    %v974 = vsel %vm211, %v970, 0
    %976 = vmatprep.subr.mxu0 0.0
    %977 = vmatpush1.msra.mxu0 %v349
    %978 = vmatprep.subr.mxu0 0.0
    %979 = vmatpush1.msra.mxu0 %v350
    %980 = vmatprep.subr.mxu0 0.0
    %981 = vmatpush1.msra.mxu0 %v351
    %982 = vmatprep.subr.mxu0 0.0
    %983 = vmatpush1.msra.mxu0 %v352
    %984 = vmatprep.subr.mxu0 0.0
    %985 = vmatpush1.msra.mxu0 0.0
    %986 = vmatprep.subr.mxu0 0.0
    %987 = vmatpush1.msra.mxu0 0.0
    %988 = vmatprep.subr.mxu0 0.0
    %989 = vmatpush1.msra.mxu0 0.0
    %990 = vmatprep.subr.mxu0 0.0
    %991 = vmatpush1.msra.mxu0 0.0
    %992 = vmatprep.subr.mxu0 0.0
    %993 = vmatpush1.msra.mxu0 0.0
    %994 = vmatprep.subr.mxu0 0.0
    %995 = vmatpush1.msra.mxu0 0.0
    %996 = vmatprep.subr.mxu0 0.0
    %997 = vmatpush1.msra.mxu0 0.0
    %998 = vmatprep.subr.mxu0 0.0
    %999 = vmatpush1.msra.mxu0 0.0
    %1000 = vmatprep.subr.mxu0 0.0
    %1001 = vmatpush1.msra.mxu0 0.0
    %1002 = vmatprep.subr.mxu0 0.0
    %1003 = vmatpush1.msra.mxu0 0.0
    %1004 = vmatprep.subr.mxu0 0.0
    %1005 = vmatpush1.msra.mxu0 0.0
    %1006 = vmatprep.subr.mxu0 0.0
    %1007 = vmatpush1.msra.mxu0 0.0
    %1008 = vmatprep.subr.mxu0 0.0
    %1009 = vmatpush1.msra.mxu0 0.0
    %1010 = vmatprep.subr.mxu0 0.0
    %1011 = vmatpush1.msra.mxu0 0.0
    %1012 = vmatprep.subr.mxu0 0.0
    %1013 = vmatpush1.msra.mxu0 0.0
    %1014 = vmatprep.subr.mxu0 0.0
    %1015 = vmatpush1.msra.mxu0 0.0
    %1016 = vmatprep.subr.mxu0 0.0
    %1017 = vmatpush1.msra.mxu0 0.0
    %1018 = vmatprep.subr.mxu0 0.0
    %1019 = vmatpush1.msra.mxu0 0.0
    %1020 = vmatprep.subr.mxu0 0.0
    %1021 = vmatpush1.msra.mxu0 0.0
    %1022 = vmatprep.subr.mxu0 0.0
    %1023 = vmatpush1.msra.mxu0 0.0
    %1024 = vmatprep.subr.mxu0 0.0
    %1025 = vmatpush1.msra.mxu0 0.0
    %1026 = vmatprep.subr.mxu0 0.0
    %1027 = vmatpush1.msra.mxu0 0.0
    %1028 = vmatprep.subr.mxu0 0.0
    %1029 = vmatpush1.msra.mxu0 0.0
    %1030 = vmatprep.subr.mxu0 0.0
    %1031 = vmatpush1.msra.mxu0 0.0
    %1032 = vmatprep.subr.mxu0 0.0
    %1033 = vmatpush1.msra.mxu0 0.0
    %1034 = vmatprep.subr.mxu0 0.0
    %1035 = vmatpush1.msra.mxu0 0.0
    %1036 = vmatprep.subr.mxu0 0.0
    %1037 = vmatpush1.msra.mxu0 0.0
    %1038 = vmatprep.subr.mxu0 0.0
    %1039 = vmatpush1.msra.mxu0 0.0
    %1040 = vmatprep.mubr.f32.mxu0 0.0
    %1041 = vmatmul.mubr.f32.gmra.mrb[0].mxu0 %v974
    %v1042 = vpop.f32.mrb[0].mxu0
    %v1043 = vadd.f32 0.0, %v1042
    %v1044 = vpop.f32.mrb[0].mxu0
    %1045 = vdwg.mxu0
    %v1046 = vadd.f32 %v973, %v1043
    %v1047 = vxor.u32 %v1046, 2147483648
    %v1048 = vmul.f32 %v1047, 1.442695
    %v1049 = vpow.pop %v1048
    %v1050 = vadd.f32 %v1049, 1.0
    %v1051 = vrcp.pop %v1050
    %v1052 = vmul.f32 1.0, %v1051
    %v1053 = vtanh.pop %v1046
    %v1054 = vmul.f32 %v1052, %v961
    %1056 = vrot.lane.b32.xlu0 %v1053, 64
    %v1057 = vpop.permute.xlu0 %1056
    %v1059 = vmul.f32 %v1052, %v1057
    %1061 = vrot.lane.b32.xlu0 %v1059, 32
    %v1062 = vpop.permute.xlu0 %1061
    %v1064 = vadd.f32 %v1054, %v1062
    %v1065 = vtanh.pop %v1064
    %1067 = vrot.lane.b32.xlu0 %v1065, 64
    %v1068 = vpop.permute.xlu0 %1067
    %v1070 = vmul.f32 %v1052, %v1068
    %1072 = vrot.lane.b32.xlu0 %v1070, 32
    %v1073 = vpop.permute.xlu0 %1072
    %1075 = vst.msk [vmem:[#allocation2 + $0x38] sm:$0xff] %vm211, %v1073
    %v1076 = vld [vmem:[#allocation2] sm:$0xff]
    %v1077 = vld [vmem:[#allocation2 + $0x8] sm:$0xff]
    %v1078 = vld [vmem:[#allocation2 + $0x10] sm:$0xff]
    %v1079 = vld [vmem:[#allocation2 + $0x18] sm:$0xff]
    %v1080 = vld [vmem:[#allocation2 + $0x20] sm:$0xff]
    %v1081 = vld [vmem:[#allocation2 + $0x28] sm:$0xff]
    %v1082 = vld [vmem:[#allocation2 + $0x30] sm:$0xff]
    %v1083 = vld [vmem:[#allocation2 + $0x38] sm:$0xff]
    %v1084 = vld [vmem:[%s1] sm:$0xff]
    %v1085 = vld [vmem:[%s1 + $0x8] sm:$0xff]
    %v1086 = vld [vmem:[%s1 + $0x10] sm:$0xff]
    %v1087 = vld [vmem:[%s1 + $0x18] sm:$0xff]
    %v1088 = vld [vmem:[%s1 + $0x20] sm:$0xff]
    %v1089 = vld [vmem:[%s1 + $0x28] sm:$0xff]
    %v1090 = vld [vmem:[%s1 + $0x30] sm:$0xff]
    %v1091 = vld [vmem:[%s1 + $0x38] sm:$0xff]
    %v1092 = vld [vmem:[%s1 + $0x40] sm:$0xff]
    %v1093 = vld [vmem:[%s1 + $0x48] sm:$0xff]
    %v1094 = vld [vmem:[%s1 + $0x50] sm:$0xff]
    %v1095 = vld [vmem:[%s1 + $0x58] sm:$0xff]
    %v1096 = vld [vmem:[%s1 + $0x60] sm:$0xff]
    %v1097 = vld [vmem:[%s1 + $0x68] sm:$0xff]
    %v1098 = vld [vmem:[%s1 + $0x70] sm:$0xff]
    %v1099 = vld [vmem:[%s1 + $0x78] sm:$0xff]
    %v1101 = vsel %vm211, %v1076, 0
    %v1104 = vsel %vm211, %v1077, 0
    %v1107 = vsel %vm211, %v1078, 0
    %v1110 = vsel %vm211, %v1079, 0
    %v1113 = vsel %vm211, %v1080, 0
    %v1116 = vsel %vm211, %v1081, 0
    %v1119 = vsel %vm211, %v1082, 0
    %v1122 = vsel %vm211, %v1083, 0
    %v1125 = vsel %vm211, %v1084, 0
    %v1128 = vsel %vm211, %v1085, 0
    %v1131 = vsel %vm211, %v1086, 0
    %v1134 = vsel %vm211, %v1087, 0
    %v1137 = vsel %vm211, %v1088, 0
    %v1140 = vsel %vm211, %v1089, 0
    %v1143 = vsel %vm211, %v1090, 0
    %v1146 = vsel %vm211, %v1091, 0
    %v1149 = vsel %vm211, %v1092, 0
    %v1152 = vsel %vm211, %v1093, 0
    %v1155 = vsel %vm211, %v1094, 0
    %v1158 = vsel %vm211, %v1095, 0
    %v1161 = vsel %vm211, %v1096, 0
    %v1164 = vsel %vm211, %v1097, 0
    %v1167 = vsel %vm211, %v1098, 0
    %v1170 = vsel %vm211, %v1099, 0
    %1172 = vmatprep.subr.mxu0 0.0
    %1173 = vmatpush1.xpose.msra.mxu0 %v1125
    %1174 = vmatprep.subr.mxu0 0.0
    %1175 = vmatpush1.xpose.msra.mxu0 %v1128
    %1176 = vmatprep.subr.mxu0 0.0
    %1177 = vmatpush1.xpose.msra.mxu0 %v1131
    %1178 = vmatprep.subr.mxu0 0.0
    %1179 = vmatpush1.xpose.msra.mxu0 %v1134
    %1180 = vmatprep.subr.mxu0 0.0
    %1181 = vmatpush1.xpose.msra.mxu0 %v1137
    %1182 = vmatprep.subr.mxu0 0.0
    %1183 = vmatpush1.xpose.msra.mxu0 %v1140
    %1184 = vmatprep.subr.mxu0 0.0
    %1185 = vmatpush1.xpose.msra.mxu0 %v1143
    %1186 = vmatprep.subr.mxu0 0.0
    %1187 = vmatpush1.xpose.msra.mxu0 %v1146
    %1188 = vmatprep.subr.mxu0 0.0
    %1189 = vmatpush1.xpose.msra.mxu0 %v1149
    %1190 = vmatprep.subr.mxu0 0.0
    %1191 = vmatpush1.xpose.msra.mxu0 %v1152
    %1192 = vmatprep.subr.mxu0 0.0
    %1193 = vmatpush1.xpose.msra.mxu0 %v1155
    %1194 = vmatprep.subr.mxu0 0.0
    %1195 = vmatpush1.xpose.msra.mxu0 %v1158
    %1196 = vmatprep.subr.mxu0 0.0
    %1197 = vmatpush1.xpose.msra.mxu0 %v1161
    %1198 = vmatprep.subr.mxu0 0.0
    %1199 = vmatpush1.xpose.msra.mxu0 %v1164
    %1200 = vmatprep.subr.mxu0 0.0
    %1201 = vmatpush1.xpose.msra.mxu0 %v1167
    %1202 = vmatprep.subr.mxu0 0.0
    %1203 = vmatpush1.xpose.msra.mxu0 %v1170
    %1204 = vmatprep.subr.mxu0 0.0
    %1205 = vmatpush1.xpose.msra.mxu0 0.0
    %1206 = vmatprep.subr.mxu0 0.0
    %1207 = vmatpush1.xpose.msra.mxu0 0.0
    %1208 = vmatprep.subr.mxu0 0.0
    %1209 = vmatpush1.xpose.msra.mxu0 0.0
    %1210 = vmatprep.subr.mxu0 0.0
    %1211 = vmatpush1.xpose.msra.mxu0 0.0
    %1212 = vmatprep.subr.mxu0 0.0
    %1213 = vmatpush1.xpose.msra.mxu0 0.0
    %1214 = vmatprep.subr.mxu0 0.0
    %1215 = vmatpush1.xpose.msra.mxu0 0.0
    %1216 = vmatprep.subr.mxu0 0.0
    %1217 = vmatpush1.xpose.msra.mxu0 0.0
    %1218 = vmatprep.subr.mxu0 0.0
    %1219 = vmatpush1.xpose.msra.mxu0 0.0
    %1220 = vmatprep.subr.mxu0 0.0
    %1221 = vmatpush1.xpose.msra.mxu0 0.0
    %1222 = vmatprep.subr.mxu0 0.0
    %1223 = vmatpush1.xpose.msra.mxu0 0.0
    %1224 = vmatprep.subr.mxu0 0.0
    %1225 = vmatpush1.xpose.msra.mxu0 0.0
    %1226 = vmatprep.subr.mxu0 0.0
    %1227 = vmatpush1.xpose.msra.mxu0 0.0
    %1228 = vmatprep.subr.mxu0 0.0
    %1229 = vmatpush1.xpose.msra.mxu0 0.0
    %1230 = vmatprep.subr.mxu0 0.0
    %1231 = vmatpush1.xpose.msra.mxu0 0.0
    %1232 = vmatprep.subr.mxu0 0.0
    %1233 = vmatpush1.xpose.msra.mxu0 0.0
    %1234 = vmatprep.subr.mxu0 0.0
    %1235 = vmatpush1.xpose.msra.mxu0 0.0
    %1236 = vmatprep.mubr.f32.mxu0 0.0
    %1237 = vmatmul.mubr.f32.gmra.mrb[0].mxu0 %v1101
    %v1238 = vpop.f32.mrb[0].mxu0
    %v1239 = vadd.f32 0.0, %v1238
    %v1240 = vpop.f32.mrb[0].mxu0
    %1241 = vmatprep.mubr.f32.mxu0 0.0
    %1242 = vmatmul.mubr.f32.gmra.mrb[0].mxu0 %v1104
    %v1243 = vpop.f32.mrb[0].mxu0
    %v1244 = vadd.f32 0.0, %v1243
    %v1245 = vpop.f32.mrb[0].mxu0
    %1246 = vmatprep.mubr.f32.mxu0 0.0
    %1247 = vmatmul.mubr.f32.gmra.mrb[0].mxu0 %v1107
    %v1248 = vpop.f32.mrb[0].mxu0
    %v1249 = vadd.f32 0.0, %v1248
    %v1250 = vpop.f32.mrb[0].mxu0
    %1251 = vmatprep.mubr.f32.mxu0 0.0
    %1252 = vmatmul.mubr.f32.gmra.mrb[0].mxu0 %v1110
    %v1253 = vpop.f32.mrb[0].mxu0
    %v1254 = vadd.f32 0.0, %v1253
    %v1255 = vpop.f32.mrb[0].mxu0
    %1256 = vmatprep.mubr.f32.mxu0 0.0
    %1257 = vmatmul.mubr.f32.gmra.mrb[0].mxu0 %v1113
    %v1258 = vpop.f32.mrb[0].mxu0
    %v1259 = vadd.f32 0.0, %v1258
    %v1260 = vpop.f32.mrb[0].mxu0
    %1261 = vmatprep.mubr.f32.mxu0 0.0
    %1262 = vmatmul.mubr.f32.gmra.mrb[0].mxu0 %v1116
    %v1263 = vpop.f32.mrb[0].mxu0
    %v1264 = vadd.f32 0.0, %v1263
    %v1265 = vpop.f32.mrb[0].mxu0
    %1266 = vmatprep.mubr.f32.mxu0 0.0
    %1267 = vmatmul.mubr.f32.gmra.mrb[0].mxu0 %v1119
    %v1268 = vpop.f32.mrb[0].mxu0
    %v1269 = vadd.f32 0.0, %v1268
    %v1270 = vpop.f32.mrb[0].mxu0
    %1271 = vmatprep.mubr.f32.mxu0 0.0
    %1272 = vmatmul.mubr.f32.gmra.mrb[0].mxu0 %v1122
    %v1273 = vpop.f32.mrb[0].mxu0
    %v1274 = vadd.f32 0.0, %v1273
    %v1275 = vpop.f32.mrb[0].mxu0
    %1276 = vdwg.mxu0
    %1277 = vst [vmem:[#allocation4] sm:$0xff] %v1239
    %1278 = vst [vmem:[#allocation4 + $0x8] sm:$0xff] %v1244
    %1279 = vst [vmem:[#allocation4 + $0x10] sm:$0xff] %v1249
    %1280 = vst [vmem:[#allocation4 + $0x18] sm:$0xff] %v1254
    %1281 = vst [vmem:[#allocation4 + $0x20] sm:$0xff] %v1259
    %1282 = vst [vmem:[#allocation4 + $0x28] sm:$0xff] %v1264
    %1283 = vst [vmem:[#allocation4 + $0x30] sm:$0xff] %v1269
    %1284 = vst [vmem:[#allocation4 + $0x38] sm:$0xff] %v1274
    // Predicated region
    $region22: #{vvul_forward.1} parent=1 // pred_check
      _
    $region23: #{vvul_forward.1} parent=1 // pred_check_branch
      %1286 = sbr.rel (0) target = $region25
    $region24: #{vvul_forward.1} parent=1 // pred_region
      %s1288 = ssub.s32 1024, 1024
      %1289 = vsyncadd [#allocation5], %s1288
      %s1290 = sshll.u32 [#allocation4], 4
      %s1291 = int_to_ptr.vmem [resolvable:$true] %s1290
      %1296 = dma.vmem_to_hbm [thread:$0]  %s1291, 1024, %s5, [#allocation5], 128, 128, 8
    $region25: #{vvul_forward.1} parent=1 // pred_fallthru
      _
    // Predicated region
    $region26: #{vvul_forward.1} parent=1 // pred_check
      _
    $region27: #{vvul_forward.1} parent=1 // pred_check_branch
      %1298 = sbr.rel (0) target = $region29
    $region28: #{vvul_forward.1} parent=1 // pred_region
      %1299 = dma.done [#allocation5], 1024
    $region29: #{vvul_forward.1} parent=1 // pred_fallthru
      _
    %1300 = vsyncpa [#allocation5], 1

</llo_original>
